<compile_context>
chip_gen: v7x
topology: tpu7x:2x2x1
jax: 0.10.0
libtpu: 0.0.40
codegen_flags: <defaults>
</compile_context>

<pallas_src>
import functools

import jax
import jax.numpy as jnp
from jax.experimental import pallas as pl
from jax.experimental.pallas import tpu as pltpu

INPUT_SIZE = 1
HIDDEN_SIZE = 16
OUTPUT_SIZE = 1

_MATMUL_PRECISION = jax.lax.Precision.HIGHEST


def _softplus(x):
    # torch.nn.Softplus(beta=1, threshold=20): log1p(exp(x)) for x <= 20, else x.
    # No explicit clamp: the where selects x for x > 20, so a (finite or inf)
    # log1p(exp(x)) in the masked branch is irrelevant for the forward value.
    return jnp.where(x > 20.0, x, jnp.log1p(jnp.exp(x)))


def _round_up(a, b):
    return ((a + b - 1) // b) * b


def make_mlp_kernel(compute_dtype):
    """compute_dtype: jnp.float32 (all generations) or jnp.bfloat16 (v6e/v7x only)."""

    def mlp_kernel(x_ref, small_ref, w23_ref, o_ref):
        cd = compute_dtype

        # Packed small constants: (16, 6) = [w1 | w4^T | b1 | b2 | b3 | b4(row 0)].
        small = small_ref[...]
        w1 = small[:, 0:1].astype(cd)            # (16, 1)
        w4t = small[:, 1:2]                      # (16, 1) kept f32 for the reduce
        b1 = small[:, 2:3].astype(cd)            # (16, 1)
        b2 = small[:, 3:4].astype(cd)            # (16, 1)
        b3 = small[:, 4:5].astype(cd)            # (16, 1)
        b4 = small[0:1, 5:6]                     # (1, 1)  f32

        x = x_ref[...].astype(cd)                # (1, S) samples on lanes

        # Layer 1 (in=1): K=1 contraction -> pure VPU broadcast multiply-add.
        h = _softplus(w1 * x + b1)               # (16, S)

        # Layers 2, 3: 16x16 weights, S-wide batch on lanes -> MXU matmuls.
        w2 = w23_ref[0:HIDDEN_SIZE, :].astype(cd)            # (16, 16)
        w3 = w23_ref[HIDDEN_SIZE:2 * HIDDEN_SIZE, :].astype(cd)
        h = _softplus(
            jnp.dot(w2, h, preferred_element_type=jnp.float32,
                    precision=_MATMUL_PRECISION).astype(cd) + b2)
        h = _softplus(
            jnp.dot(w3, h, preferred_element_type=jnp.float32,
                    precision=_MATMUL_PRECISION).astype(cd) + b3)

        # Layer 4 (out=1): N=1 contraction -> VPU multiply + sublane (XLU) reduce.
        y = jnp.sum(w4t * h.astype(jnp.float32), axis=0, keepdims=True) + b4  # (1, S)
        o_ref[...] = y.astype(o_ref.dtype)

    return mlp_kernel


def feedforward_net(x, params, *, tile_n=16384, compute_dtype=jnp.float32,
                    vmem_limit_bytes=32 * 1024 * 1024):
    """x: (N, INPUT_SIZE) float32. params: PyTorch-layout w1..w4 / b1..b4.

    tile_n: samples per grid step (multiple of 128). Default 16384 keeps the live
    VMEM footprint (~300 B/sample incl. sublane-padded I/O) around 5-7 MiB, which
    fits every generation's scoped VMEM once vmem_limit_bytes is raised to 32 MiB.
    """
    N, in_dim = x.shape
    assert in_dim == INPUT_SIZE

    # Sanitize tile, then cap it so the grid has >= 2 steps when the batch allows it
    # (lets the "parallel" grid axis feed both v7x TensorCores). v5e/v6e are unaffected.
    tile_n = max(128, _round_up(int(tile_n), 128))
    tile_eff = max(128, min(tile_n, _round_up(pl.cdiv(N, 2), 128)))

    # Pad the batch to a multiple of the tile (wrapper-side padding, sliced after).
    n_pad = _round_up(N, tile_eff)
    grid = (n_pad // tile_eff,)

    x_lanes = jnp.zeros((1, n_pad), jnp.float32).at[0, :N].set(x[:, 0])

    w1, b1 = params["w1"], params["b1"]      # (16, 1),  (16, 1)
    w2, b2 = params["w2"], params["b2"]      # (16, 16), (16, 1)
    w3, b3 = params["w3"], params["b3"]      # (16, 16), (16, 1)
    w4, b4 = params["w4"], params["b4"]      # (1, 16),  (1, 1)

    # Pack the 9 constant operands into 2 arrays (fewer DMA descriptors / double
    # buffers / padded VMEM tiles): small (16, 6) and w23 (32, 16).
    small = jnp.zeros((HIDDEN_SIZE, 6), jnp.float32)
    small = small.at[:, 0:1].set(w1)
    small = small.at[:, 1:2].set(w4.T)
    small = small.at[:, 2:3].set(b1)
    small = small.at[:, 3:4].set(b2)
    small = small.at[:, 4:5].set(b3)
    small = small.at[0:1, 5:6].set(b4)
    w23 = jnp.concatenate([w2, w3], axis=0)  # (32, 16), sublane-aligned halves

    def const_map(i):
        return (0, 0)

    kernel = make_mlp_kernel(jnp.dtype(compute_dtype))

    out = pl.pallas_call(
        kernel,
        out_shape=jax.ShapeDtypeStruct((1, n_pad), jnp.float32),
        grid_spec=pltpu.PrefetchScalarGridSpec(
            num_scalar_prefetch=0,
            grid=grid,
            in_specs=[
                pl.BlockSpec((1, tile_eff), lambda i: (0, i)),   # x tile (lane-dense)
                pl.BlockSpec(small.shape, const_map),            # packed w1/w4t/biases
                pl.BlockSpec(w23.shape, const_map),              # packed w2 ; w3
            ],
            out_specs=pl.BlockSpec((1, tile_eff), lambda i: (0, i)),  # lane-dense out
        ),
        compiler_params=pltpu.CompilerParams(
            dimension_semantics=("parallel",),
            vmem_limit_bytes=int(vmem_limit_bytes),
        ),
    )(x_lanes, small, w23)

    return out[0, :N].reshape(N, OUTPUT_SIZE)


def init_params(key):
    """Deterministic init mimicking PyTorch nn.Linear default (uniform +-1/sqrt(fan_in)).

    Stored in PyTorch layout: W (out, in), b (out, 1).
    """
    def linear(key, fan_in, fan_out):
        kw, kb = jax.random.split(key)
        bound = 1.0 / (fan_in ** 0.5)
        w = jax.random.uniform(kw, (fan_out, fan_in), jnp.float32, -bound, bound)
        b = jax.random.uniform(kb, (fan_out, 1), jnp.float32, -bound, bound)
        return w, b

    k1, k2, k3, k4 = jax.random.split(key, 4)
    w1, b1 = linear(k1, INPUT_SIZE, HIDDEN_SIZE)
    w2, b2 = linear(k2, HIDDEN_SIZE, HIDDEN_SIZE)
    w3, b3 = linear(k3, HIDDEN_SIZE, HIDDEN_SIZE)
    w4, b4 = linear(k4, HIDDEN_SIZE, OUTPUT_SIZE)
    return {"w1": w1, "b1": b1, "w2": w2, "b2": b2,
            "w3": w3, "b3": b3, "w4": w4, "b4": b4}


def reference_forward(x, params):
    """Pure-JAX reference matching torch semantics (y = x W^T + b), full-f32 matmuls."""
    dot = functools.partial(jnp.dot, precision=_MATMUL_PRECISION)
    h = _softplus(dot(x, params["w1"].T) + params["b1"].T)
    h = _softplus(dot(h, params["w2"].T) + params["b2"].T)
    h = _softplus(dot(h, params["w3"].T) + params["b3"].T)
    return dot(h, params["w4"].T) + params["b4"].T


if __name__ == "__main__":
    key = jax.random.PRNGKey(0)
    kx, kp = jax.random.split(key)

    # Non-multiple-of-tile batch to exercise wrapper padding; tile is capped to 512
    # here so the grid stays 2 steps (both v7x TensorCores busy even at small N).
    N = 1000
    x = jax.random.normal(kx, (N, INPUT_SIZE), jnp.float32)
    params = init_params(kp)

    out = feedforward_net(x, params)            # f32 path: valid on v5e/v6e/v7x
    out = jax.block_until_ready(out)

    ref = reference_forward(x, params)
    assert out.shape == (N, OUTPUT_SIZE)
    assert jnp.allclose(out, ref, atol=1e-5, rtol=1e-5), \
        float(jnp.max(jnp.abs(out - ref)))

    print("KERNEL_OK")
</pallas_src>

<mosaic_0001>
module attributes {stable_mosaic.version = 11 : i64} {
  func.func @mlp_kernel(%arg0: i32, %arg1: memref<1x512xf32, #tpu.memory_space<vmem>>, %arg2: memref<16x6xf32, #tpu.memory_space<vmem>>, %arg3: memref<32x16xf32, #tpu.memory_space<vmem>>, %arg4: memref<1x512xf32, #tpu.memory_space<vmem>>) attributes {dimension_semantics = [#tpu.dimension_semantics<parallel>], iteration_bounds = array<i64: 2>, scalar_prefetch = 0 : i64, scratch_operands = 0 : i64, tpu.core_type = #tpu.core_type<tc>, window_params = [{transform_indices = @transform_0, window_bounds = array<i64: 1, 512>}, {pipeline_mode = #tpu.pipeline_mode<synchronous>, transform_indices = @transform_1, window_bounds = array<i64: 16, 6>}, {pipeline_mode = #tpu.pipeline_mode<synchronous>, transform_indices = @transform_2, window_bounds = array<i64: 32, 16>}, {transform_indices = @transform_3, window_bounds = array<i64: 1, 512>}]} {
    %c0 = arith.constant 0 : index
    %c0_0 = arith.constant 0 : index
    %0 = vector.load %arg2[%c0, %c0_0] : memref<16x6xf32, #tpu.memory_space<vmem>>, vector<16x6xf32>
    %1 = vector.extract_strided_slice %0 {offsets = [0, 0], sizes = [16, 1], strides = [1, 1]} : vector<16x6xf32> to vector<16x1xf32>
    %2 = vector.extract_strided_slice %0 {offsets = [0, 1], sizes = [16, 1], strides = [1, 1]} : vector<16x6xf32> to vector<16x1xf32>
    %3 = vector.extract_strided_slice %0 {offsets = [0, 2], sizes = [16, 1], strides = [1, 1]} : vector<16x6xf32> to vector<16x1xf32>
    %4 = vector.extract_strided_slice %0 {offsets = [0, 3], sizes = [16, 1], strides = [1, 1]} : vector<16x6xf32> to vector<16x1xf32>
    %5 = vector.extract_strided_slice %0 {offsets = [0, 4], sizes = [16, 1], strides = [1, 1]} : vector<16x6xf32> to vector<16x1xf32>
    %6 = vector.extract_strided_slice %0 {offsets = [0, 5], sizes = [1, 1], strides = [1, 1]} : vector<16x6xf32> to vector<1x1xf32>
    %c0_1 = arith.constant 0 : index
    %c0_2 = arith.constant 0 : index
    %7 = vector.load %arg1[%c0_1, %c0_2] : memref<1x512xf32, #tpu.memory_space<vmem>>, vector<1x512xf32>
    %8 = vector.broadcast %1 : vector<16x1xf32> to vector<16x512xf32>
    %9 = vector.broadcast %7 : vector<1x512xf32> to vector<16x512xf32>
    %10 = arith.mulf %8, %9 : vector<16x512xf32>
    %11 = vector.broadcast %3 : vector<16x1xf32> to vector<16x512xf32>
    %12 = arith.addf %10, %11 : vector<16x512xf32>
    %cst = arith.constant 2.000000e+01 : f32
    %13 = vector.broadcast %cst : f32 to vector<16x512xf32>
    %14 = arith.cmpf ogt, %12, %13 : vector<16x512xf32>
    %15 = math.exp %12 : vector<16x512xf32>
    %16 = math.log1p %15 : vector<16x512xf32>
    %17 = arith.select %14, %12, %16 : vector<16x512xi1>, vector<16x512xf32>
    %c0_3 = arith.constant 0 : index
    %c0_4 = arith.constant 0 : index
    %18 = vector.load %arg3[%c0_3, %c0_4] : memref<32x16xf32, #tpu.memory_space<vmem>>, vector<16x16xf32>
    %c16 = arith.constant 16 : index
    %c0_5 = arith.constant 0 : index
    %19 = vector.load %arg3[%c16, %c0_5] : memref<32x16xf32, #tpu.memory_space<vmem>>, vector<16x16xf32>
    %cst_6 = arith.constant dense<0.000000e+00> : vector<16x512xf32>
    %20 = tpu.matmul %18, %17, %cst_6 {dimension_numbers = #tpu.dot_dimension_numbers<[1], [0], [0], [1], [0, 0, 1, 1], [], []>, precision = #tpu.contract_precision<fp32>} : vector<16x16xf32>, vector<16x512xf32>, vector<16x512xf32> -> vector<16x512xf32>
    %21 = vector.broadcast %4 : vector<16x1xf32> to vector<16x512xf32>
    %22 = arith.addf %20, %21 : vector<16x512xf32>
    %cst_7 = arith.constant 2.000000e+01 : f32
    %23 = vector.broadcast %cst_7 : f32 to vector<16x512xf32>
    %24 = arith.cmpf ogt, %22, %23 : vector<16x512xf32>
    %25 = math.exp %22 : vector<16x512xf32>
    %26 = math.log1p %25 : vector<16x512xf32>
    %27 = arith.select %24, %22, %26 : vector<16x512xi1>, vector<16x512xf32>
    %cst_8 = arith.constant dense<0.000000e+00> : vector<16x512xf32>
    %28 = tpu.matmul %19, %27, %cst_8 {dimension_numbers = #tpu.dot_dimension_numbers<[1], [0], [0], [1], [0, 0, 1, 1], [], []>, precision = #tpu.contract_precision<fp32>} : vector<16x16xf32>, vector<16x512xf32>, vector<16x512xf32> -> vector<16x512xf32>
    %29 = vector.broadcast %5 : vector<16x1xf32> to vector<16x512xf32>
    %30 = arith.addf %28, %29 : vector<16x512xf32>
    %cst_9 = arith.constant 2.000000e+01 : f32
    %31 = vector.broadcast %cst_9 : f32 to vector<16x512xf32>
    %32 = arith.cmpf ogt, %30, %31 : vector<16x512xf32>
    %33 = math.exp %30 : vector<16x512xf32>
    %34 = math.log1p %33 : vector<16x512xf32>
    %35 = arith.select %32, %30, %34 : vector<16x512xi1>, vector<16x512xf32>
    %36 = vector.broadcast %2 : vector<16x1xf32> to vector<16x512xf32>
    %37 = arith.mulf %36, %35 : vector<16x512xf32>
    %cst_10 = arith.constant dense<0.000000e+00> : vector<512xf32>
    %38 = vector.multi_reduction <add>, %37, %cst_10 [0] : vector<16x512xf32> to vector<512xf32>
    %39 = vector.shape_cast %38 : vector<512xf32> to vector<1x512xf32>
    %40 = vector.broadcast %6 : vector<1x1xf32> to vector<1x512xf32>
    %41 = arith.addf %39, %40 : vector<1x512xf32>
    %c0_11 = arith.constant 0 : index
    %c0_12 = arith.constant 0 : index
    %42 = vector.load %arg4[%c0_11, %c0_12] : memref<1x512xf32, #tpu.memory_space<vmem>>, vector<1x512xf32>
    tpu.vector_store %arg4[%c0_11, %c0_12], %41 {strides = array<i32>} : memref<1x512xf32, #tpu.memory_space<vmem>>, vector<1x512xf32>,
    return
  }
  func.func @transform_0(%arg0: i32) -> (i32, i32) {
    %c0_i32 = arith.constant 0 : i32
    %c0_i32_0 = arith.constant 0 : i32
    return %c0_i32, %arg0 : i32, i32
  }
  func.func @transform_1(%arg0: i32) -> (i32, i32) {
    %c0_i32 = arith.constant 0 : i32
    %c0_i32_0 = arith.constant 0 : i32
    %c0_i32_1 = arith.constant 0 : i32
    return %c0_i32, %c0_i32_0 : i32, i32
  }
  func.func @transform_2(%arg0: i32) -> (i32, i32) {
    %c0_i32 = arith.constant 0 : i32
    %c0_i32_0 = arith.constant 0 : i32
    %c0_i32_1 = arith.constant 0 : i32
    return %c0_i32, %c0_i32_0 : i32, i32
  }
  func.func @transform_3(%arg0: i32) -> (i32, i32) {
    %c0_i32 = arith.constant 0 : i32
    %c0_i32_0 = arith.constant 0 : i32
    return %c0_i32, %arg0 : i32, i32
  }
}

</mosaic_0001>

<llo_original>
// kernel: tpu_custom_call.1
$region0: #{tpu_custom_call.1}
  #allocation0 [shape = 'u32[]', space=smem, size = 0x4, offset = 0x4, fixed_abs, tag = 'smem constant byte address 0x4 - core index']
  #allocation1 [shape = 'u32[144,128]{1,0:T(1,128)}', space=vmem, size = 0x12000, scoped, tag = 'internal scratch']
  %s0 = inlined_call_operand.vmem [shape: f32[1,1024], index: 0, kind: input, shape index: {}]
  %s1 = inlined_call_operand.vmem [shape: f32[16,6], index: 1, kind: input, shape index: {}]
  %s2 = inlined_call_operand.vmem [shape: f32[32,16], index: 2, kind: input, shape index: {}]
  %s3 = inlined_call_operand.hbm [shape: f32[1,1024], index: 3, kind: output, shape index: {}]
  %s4 = sld [smem:[#allocation0]]
  $region45: #{tpu_custom_call.1} parent=0
    _
  %s6 = ssub.s32 1, %s4
  %s7 = scalar_select 0, %s6, %s4
  $region1: #{tpu_custom_call.1} parent=0
    #allocation2 [shape = 'u8[4096]{0}', space=vmem, size = 0x1000, scoped, tag = 'output window, operand 0']
    #allocation3 [shape = 's32[2]{0}', space=sflag, size = 0x8, scoped, tag = 'scoped memory for tpu_custom_call.1']
    %8 = vsyncpa [#allocation3], 0
    %s9 = scalar_lea.sflag [#allocation3], 1
    %10 = vsyncpa %s9, 0
    loop: start=0, step=1, limit=4
    $region2: #{tpu_custom_call.1} parent=1 // loop_pre_header
      _
    $region3: #{tpu_custom_call.1} parent=1 // loop_header
      %s12 = sphi 0, %s16
      %p13 = scmp.ge.s32.totalorder %s12, 4
      %s22 = sphi 0, %s24
      %s25 = sphi 0, %s22
      %s26 = sphi 0, %s25
      %s42 = sphi 0, %s26
      %s46 = sphi 0, %s46
      %s48 = sphi 0, %s46
      %s49 = sphi 0, %s48
      %s63 = sphi 0, %s49
      %s67 = sphi 0, %s67
      %s69 = sphi 0, %s67
      %s70 = sphi 0, %s69
      %s84 = sphi 0, %s70
      %s90 = sphi 0, %s92
      %s93 = sphi 0, %s90
      %s94 = sphi 0, %s93
      %s110 = sphi 0, %s94
    $region4: #{tpu_custom_call.1} parent=1 // loop_header_branch
      %15 = sbr.rel (%p13) target = $region8
    $region5: #{tpu_custom_call.1} parent=1 // loop_body
      %s17 = ssub.s32 %s12, 1
      %s18 = ssub.s32 %s12, 2
      %s19 = sadd.s32 %s12, 1
      %s20 = ssub.s32 %s12, %s19
      %p21 = scmp.eq.s32.totalorder %s20, 0
      %s23 = sadd.s32 %s22, 1
      %s24 = scalar_select %p21, %s22, %s23
      %p27 = pneg %p21
      %p28 = scmp.eq.s32.totalorder %s12, 1
      %p29 = por %p27, %p28
      %p30 = scmp.ne.s32.totalorder %s22, %s25
      %p31 = scmp.eq.s32.totalorder %s12, 0
      %p32 = por %p30, %p31
      %p33 = scmp.ne.s32.totalorder %s22, %s25
      %p34 = scmp.eq.s32.totalorder %s17, 1
      %p35 = por %p33, %p34
      %p36 = scmp.ne.s32.totalorder %s25, %s26
      %p37 = scmp.eq.s32.totalorder %s17, 0
      %p38 = por %p36, %p37
      %p39 = scmp.ne.s32.totalorder %s25, %s26
      %p40 = scmp.eq.s32.totalorder %s18, 1
      %p41 = por %p39, %p40
      %p43 = scmp.ne.s32.totalorder %s26, %s42
      %p44 = scmp.eq.s32.totalorder %s18, 0
      %p45 = por %p43, %p44
      %s47 = sadd.s32 %s46, 1
      %p50 = scmp.eq.s32.totalorder %s12, 1
      %p51 = scmp.ne.s32.totalorder %s46, %s48
      %p52 = scmp.eq.s32.totalorder %s12, 0
      %p53 = por %p51, %p52
      %p54 = scmp.ne.s32.totalorder %s46, %s48
      %p55 = scmp.eq.s32.totalorder %s17, 1
      %p56 = por %p54, %p55
      %p57 = scmp.ne.s32.totalorder %s48, %s49
      %p58 = scmp.eq.s32.totalorder %s17, 0
      %p59 = por %p57, %p58
      %p60 = scmp.ne.s32.totalorder %s48, %s49
      %p61 = scmp.eq.s32.totalorder %s18, 1
      %p62 = por %p60, %p61
      %p64 = scmp.ne.s32.totalorder %s49, %s63
      %p65 = scmp.eq.s32.totalorder %s18, 0
      %p66 = por %p64, %p65
      %s68 = sadd.s32 %s67, 1
      %p71 = scmp.eq.s32.totalorder %s12, 1
      %p72 = scmp.ne.s32.totalorder %s67, %s69
      %p73 = scmp.eq.s32.totalorder %s12, 0
      %p74 = por %p72, %p73
      %p75 = scmp.ne.s32.totalorder %s67, %s69
      %p76 = scmp.eq.s32.totalorder %s17, 1
      %p77 = por %p75, %p76
      %p78 = scmp.ne.s32.totalorder %s69, %s70
      %p79 = scmp.eq.s32.totalorder %s17, 0
      %p80 = por %p78, %p79
      %p81 = scmp.ne.s32.totalorder %s69, %s70
      %p82 = scmp.eq.s32.totalorder %s18, 1
      %p83 = por %p81, %p82
      %p85 = scmp.ne.s32.totalorder %s70, %s84
      %p86 = scmp.eq.s32.totalorder %s18, 0
      %p87 = por %p85, %p86
      %s88 = ssub.s32 %s12, %s19
      %p89 = scmp.eq.s32.totalorder %s88, 0
      %s91 = sadd.s32 %s90, 1
      %s92 = scalar_select %p89, %s90, %s91
      %p95 = pneg %p89
      %p96 = scmp.eq.s32.totalorder %s12, 1
      %p97 = por %p95, %p96
      %p98 = scmp.ne.s32.totalorder %s90, %s93
      %p99 = scmp.eq.s32.totalorder %s12, 0
      %p100 = por %p98, %p99
      %p101 = scmp.ne.s32.totalorder %s90, %s93
      %p102 = scmp.eq.s32.totalorder %s17, 1
      %p103 = por %p101, %p102
      %p104 = scmp.ne.s32.totalorder %s93, %s94
      %p105 = scmp.eq.s32.totalorder %s17, 0
      %p106 = por %p104, %p105
      %p107 = scmp.ne.s32.totalorder %s93, %s94
      %p108 = scmp.eq.s32.totalorder %s18, 1
      %p109 = por %p107, %p108
      %p111 = scmp.ne.s32.totalorder %s94, %s110
      %p112 = scmp.eq.s32.totalorder %s18, 0
      %p113 = por %p111, %p112
      %p114 = scmp.le.s32.totalorder 1, %s12
      %p115 = scmp.lt.s32.totalorder %s12, 3
      %p116 = pnand %p114, %p115
      %p117 = pneg %p116
      // Predicated region
      $region9: #{tpu_custom_call.1} parent=5 // pred_check
        _
      $region10: #{tpu_custom_call.1} parent=5 // pred_check_branch
        %119 = sbr.rel (%p116) target = $region12
      $region11: #{tpu_custom_call.1} parent=5 // pred_region
        %s120 = ssub.s32 %s12, 1
        // Predicated region
        $region13: #{tpu_custom_call.1} parent=11 // pred_check
          %p121 = pneg %p59
        $region14: #{tpu_custom_call.1} parent=11 // pred_check_branch
          %123 = sbr.rel (%p121) target = $region16
        $region15: #{tpu_custom_call.1} parent=11 // pred_region
          _
        $region16: #{tpu_custom_call.1} parent=11 // pred_fallthru
          _
        // Predicated region
        $region17: #{tpu_custom_call.1} parent=11 // pred_check
          %p124 = pneg %p80
        $region18: #{tpu_custom_call.1} parent=11 // pred_check_branch
          %126 = sbr.rel (%p124) target = $region20
        $region19: #{tpu_custom_call.1} parent=11 // pred_region
          _
        $region20: #{tpu_custom_call.1} parent=11 // pred_fallthru
          _
      $region12: #{tpu_custom_call.1} parent=5 // pred_fallthru
        _
      %p127 = scmp.lt.s32.totalorder %s12, 2
      // Predicated region
      $region21: #{tpu_custom_call.1} parent=5 // pred_check
        %p128 = pneg %p127
      $region22: #{tpu_custom_call.1} parent=5 // pred_check_branch
        %130 = sbr.rel (%p128) target = $region24
      $region23: #{tpu_custom_call.1} parent=5 // pred_region
        // Predicated region
        $region25: #{tpu_custom_call.1} parent=23 // pred_check
          %p131 = pneg %p32
        $region26: #{tpu_custom_call.1} parent=23 // pred_check_branch
          %133 = sbr.rel (%p131) target = $region28
        $region27: #{tpu_custom_call.1} parent=23 // pred_region
          %s134 = smul.u32 4, %s12
          %p135 = scmp.lt.s32.totalorder %s134, 7
          %s136 = scalar_select %p135, %s134, 7
          %s137 = scalar_lea.vmem %s0, %s136
          %s138 = smul.u32 4, %s12
        $region28: #{tpu_custom_call.1} parent=23 // pred_fallthru
          _
      $region24: #{tpu_custom_call.1} parent=5 // pred_fallthru
        _
      %p139 = scmp.le.s32.totalorder 1, %s12
      %p140 = scmp.lt.s32.totalorder %s12, 3
      %p141 = pnand %p139, %p140
      %p142 = pneg %p141
      // Predicated region
      $region29: #{tpu_custom_call.1} parent=5 // pred_check
        _
      $region30: #{tpu_custom_call.1} parent=5 // pred_check_branch
        %144 = sbr.rel (%p141) target = $region32
      $region31: #{tpu_custom_call.1} parent=5 // pred_region
        %s145 = ssub.s32 %s12, 1
        %s146 = smul.u32 4, %s17
        %p147 = scmp.lt.s32.totalorder %s146, 7
        %s148 = scalar_select %p147, %s146, 7
        %s149 = scalar_lea.vmem %s0, %s148
        %p150 = pneg %p38
        %p151 = pneg %p35
        %p152 = pneg %p59
        %p153 = pneg %p56
        %p154 = pneg %p80
        %p155 = pneg %p77
        %p156 = pneg %p106
        %p157 = pneg %p103
        %s158 = sand.u32 %s93, 1
        %s159 = scalar_lea.sflag [#allocation3], %s158
        %s160 = sand.u32 %s93, 1
        %s161 = smul.addr %s160, 4
        %s162 = scalar_lea.vmem [#allocation2], %s161
        %s163 = smul.u32 4, %s17
        %p164 = scmp.lt.s32.totalorder %s163, 7
        %s165 = scalar_select %p164, %s163, 7
        %s166 = scalar_lea.vmem %s0, %s165
        %s167 = smul.u32 4, %s17
        %s168 = smul.u32 4, %s17
        %v169 = vld [vmem:[%s1] sm:$0xff]
        %v170 = vld [vmem:[%s1 + $0x8] sm:$0xff]
        %v171 = vld [vmem:[%s166] sm:$0xf]
        %173 = vset.pattern.permute.xlu0 0
        %174 = vperm.xlu0 %173, %v169
        %v175 = vpop.permute.xlu0 %174
        %178 = vset.pattern.permute.xlu0 0
        %179 = vperm.xlu0 %178, %v170
        %v180 = vpop.permute.xlu0 %179
        %v183 = vlaneseq
        %v184 = vshrl.u32 %v183, 7
        %v185 = vsub.s32 0, %v184
        %v186 = vrot.slane %v171, %v185
        %v187 = vlaneseq
        %v188 = vshrl.u32 %v187, 7
        %v189 = vsub.s32 1, %v188
        %v190 = vrot.slane %v171, %v189
        %v191 = vlaneseq
        %v192 = vshrl.u32 %v191, 7
        %v193 = vsub.s32 2, %v192
        %v194 = vrot.slane %v171, %v193
        %v195 = vlaneseq
        %v196 = vshrl.u32 %v195, 7
        %v197 = vsub.s32 3, %v196
        %v198 = vrot.slane %v171, %v197
        %v203 = vmul.f32 %v175, %v186
        %v204 = vmul.f32 %v175, %v190
        %v205 = vmul.f32 %v175, %v194
        %v206 = vmul.f32 %v175, %v198
        %v207 = vmul.f32 %v180, %v186
        %v208 = vmul.f32 %v180, %v190
        %v209 = vmul.f32 %v180, %v194
        %v210 = vmul.f32 %v180, %v198
        %211 = vset.pattern.permute.xlu0 2
        %212 = vperm.xlu0 %211, %v169
        %v213 = vpop.permute.xlu0 %212
        %215 = vset.pattern.permute.xlu0 2
        %216 = vperm.xlu0 %215, %v170
        %v217 = vpop.permute.xlu0 %216
        %v219 = vadd.f32 %v203, %v213
        %v220 = vadd.f32 %v204, %v213
        %v221 = vadd.f32 %v205, %v213
        %v222 = vadd.f32 %v206, %v213
        %v223 = vadd.f32 %v207, %v217
        %v224 = vadd.f32 %v208, %v217
        %v225 = vadd.f32 %v209, %v217
        %v226 = vadd.f32 %v210, %v217
        %vm227 = vcmp.gt.f32.partialorder %v219, 20.0
        %vm228 = vcmp.gt.f32.partialorder %v220, 20.0
        %vm229 = vcmp.gt.f32.partialorder %v221, 20.0
        %vm230 = vcmp.gt.f32.partialorder %v222, 20.0
        %vm231 = vcmp.gt.f32.partialorder %v223, 20.0
        %vm232 = vcmp.gt.f32.partialorder %v224, 20.0
        %vm233 = vcmp.gt.f32.partialorder %v225, 20.0
        %vm234 = vcmp.gt.f32.partialorder %v226, 20.0
        %v235 = vmul.f32 %v219, 1.442695
        %v236 = vpow.pop %v235
        %v237 = vmul.f32 %v220, 1.442695
        %v238 = vpow.pop %v237
        %v239 = vmul.f32 %v221, 1.442695
        %v240 = vpow.pop %v239
        %v241 = vmul.f32 %v222, 1.442695
        %v242 = vpow.pop %v241
        %v243 = vmul.f32 %v223, 1.442695
        %v244 = vpow.pop %v243
        %v245 = vmul.f32 %v224, 1.442695
        %v246 = vpow.pop %v245
        %v247 = vmul.f32 %v225, 1.442695
        %v248 = vpow.pop %v247
        %v249 = vmul.f32 %v226, 1.442695
        %v250 = vpow.pop %v249
        %v251 = vadd.f32 %v236, 1.0
        %v252 = vlog2.pop %v251
        %v253 = vmul.f32 %v252, 0.6931472
        %v254 = vmul.f32 -0.5, %v236
        %v255 = vadd.f32 %v254, 1.0
        %v256 = vmul.f32 %v255, %v236
        %v257 = vand.u32 2147483647, %v236
        %vm258 = vcmp.lt.f32.partialorder %v257, 0.0004427343
        %v259 = vsel %vm258, %v256, %v253
        %v260 = vadd.f32 %v238, 1.0
        %v261 = vlog2.pop %v260
        %v262 = vmul.f32 %v261, 0.6931472
        %v263 = vmul.f32 -0.5, %v238
        %v264 = vadd.f32 %v263, 1.0
        %v265 = vmul.f32 %v264, %v238
        %v266 = vand.u32 2147483647, %v238
        %vm267 = vcmp.lt.f32.partialorder %v266, 0.0004427343
        %v268 = vsel %vm267, %v265, %v262
        %v269 = vadd.f32 %v240, 1.0
        %v270 = vlog2.pop %v269
        %v271 = vmul.f32 %v270, 0.6931472
        %v272 = vmul.f32 -0.5, %v240
        %v273 = vadd.f32 %v272, 1.0
        %v274 = vmul.f32 %v273, %v240
        %v275 = vand.u32 2147483647, %v240
        %vm276 = vcmp.lt.f32.partialorder %v275, 0.0004427343
        %v277 = vsel %vm276, %v274, %v271
        %v278 = vadd.f32 %v242, 1.0
        %v279 = vlog2.pop %v278
        %v280 = vmul.f32 %v279, 0.6931472
        %v281 = vmul.f32 -0.5, %v242
        %v282 = vadd.f32 %v281, 1.0
        %v283 = vmul.f32 %v282, %v242
        %v284 = vand.u32 2147483647, %v242
        %vm285 = vcmp.lt.f32.partialorder %v284, 0.0004427343
        %v286 = vsel %vm285, %v283, %v280
        %v287 = vadd.f32 %v244, 1.0
        %v288 = vlog2.pop %v287
        %v289 = vmul.f32 %v288, 0.6931472
        %v290 = vmul.f32 -0.5, %v244
        %v291 = vadd.f32 %v290, 1.0
        %v292 = vmul.f32 %v291, %v244
        %v293 = vand.u32 2147483647, %v244
        %vm294 = vcmp.lt.f32.partialorder %v293, 0.0004427343
        %v295 = vsel %vm294, %v292, %v289
        %v296 = vadd.f32 %v246, 1.0
        %v297 = vlog2.pop %v296
        %v298 = vmul.f32 %v297, 0.6931472
        %v299 = vmul.f32 -0.5, %v246
        %v300 = vadd.f32 %v299, 1.0
        %v301 = vmul.f32 %v300, %v246
        %v302 = vand.u32 2147483647, %v246
        %vm303 = vcmp.lt.f32.partialorder %v302, 0.0004427343
        %v304 = vsel %vm303, %v301, %v298
        %v305 = vadd.f32 %v248, 1.0
        %v306 = vlog2.pop %v305
        %v307 = vmul.f32 %v306, 0.6931472
        %v308 = vmul.f32 -0.5, %v248
        %v309 = vadd.f32 %v308, 1.0
        %v310 = vmul.f32 %v309, %v248
        %v311 = vand.u32 2147483647, %v248
        %vm312 = vcmp.lt.f32.partialorder %v311, 0.0004427343
        %v313 = vsel %vm312, %v310, %v307
        %v314 = vadd.f32 %v250, 1.0
        %v315 = vlog2.pop %v314
        %v316 = vmul.f32 %v315, 0.6931472
        %v317 = vmul.f32 -0.5, %v250
        %v318 = vadd.f32 %v317, 1.0
        %v319 = vmul.f32 %v318, %v250
        %v320 = vand.u32 2147483647, %v250
        %vm321 = vcmp.lt.f32.partialorder %v320, 0.0004427343
        %v322 = vsel %vm321, %v319, %v316
        %v323 = vsel %vm227, %v219, %v259
        %v324 = vsel %vm228, %v220, %v268
        %v325 = vsel %vm229, %v221, %v277
        %v326 = vsel %vm230, %v222, %v286
        %v327 = vsel %vm231, %v223, %v295
        %v328 = vsel %vm232, %v224, %v304
        %v329 = vsel %vm233, %v225, %v313
        %v330 = vsel %vm234, %v226, %v322
        %v331 = vld [vmem:[%s2] sm:$0xff]
        %v332 = vld [vmem:[%s2 + $0x8] sm:$0xff]
        %v333 = vld [vmem:[%s2 + $0x10] sm:$0xff]
        %v334 = vld [vmem:[%s2 + $0x18] sm:$0xff]
        %335 = vset.pattern.permute.xlu0 3
        %336 = vperm.xlu0 %335, %v169
        %v337 = vpop.permute.xlu0 %336
        %339 = vset.pattern.permute.xlu0 3
        %340 = vperm.xlu0 %339, %v170
        %v341 = vpop.permute.xlu0 %340
        %vm343 = vcmask 130048
        %v345 = vsel %vm343, %v331, 0
        %v348 = vsel %vm343, %v332, 0
        %v350 = vand.u32 %v324, 4294901760
        %351 = vmatprep.subr.mxu0 %v350
        %v352 = vand.u32 %v323, 4294901760
        %353 = vmatpush1.msra.mxu0 %v352
        %v354 = vand.u32 %v328, 4294901760
        %355 = vmatprep.subr.mxu0 %v354
        %v356 = vand.u32 %v327, 4294901760
        %357 = vmatpush1.msra.mxu0 %v356
        %358 = vmatprep.subr.mxu0 0.0
        %359 = vmatpush1.msra.mxu0 0.0
        %360 = vmatprep.subr.mxu0 0.0
        %361 = vmatpush1.msra.mxu0 0.0
        %362 = vmatprep.subr.mxu0 0.0
        %363 = vmatpush1.msra.mxu0 0.0
        %364 = vmatprep.subr.mxu0 0.0
        %365 = vmatpush1.msra.mxu0 0.0
        %366 = vmatprep.subr.mxu0 0.0
        %367 = vmatpush1.msra.mxu0 0.0
        %368 = vmatprep.subr.mxu0 0.0
        %369 = vmatpush1.msra.mxu0 0.0
        %370 = vmatprep.subr.mxu0 0.0
        %371 = vmatpush1.msra.mxu0 0.0
        %372 = vmatprep.subr.mxu0 0.0
        %373 = vmatpush1.msra.mxu0 0.0
        %374 = vmatprep.subr.mxu0 0.0
        %375 = vmatpush1.msra.mxu0 0.0
        %376 = vmatprep.subr.mxu0 0.0
        %377 = vmatpush1.msra.mxu0 0.0
        %378 = vmatprep.subr.mxu0 0.0
        %379 = vmatpush1.msra.mxu0 0.0
        %380 = vmatprep.subr.mxu0 0.0
        %381 = vmatpush1.msra.mxu0 0.0
        %382 = vmatprep.subr.mxu0 0.0
        %383 = vmatpush1.msra.mxu0 0.0
        %384 = vmatprep.subr.mxu0 0.0
        %385 = vmatpush1.msra.mxu0 0.0
        %386 = vmatprep.subr.mxu0 0.0
        %387 = vmatpush1.msra.mxu0 0.0
        %388 = vmatprep.subr.mxu0 0.0
        %389 = vmatpush1.msra.mxu0 0.0
        %390 = vmatprep.subr.mxu0 0.0
        %391 = vmatpush1.msra.mxu0 0.0
        %392 = vmatprep.subr.mxu0 0.0
        %393 = vmatpush1.msra.mxu0 0.0
        %394 = vmatprep.subr.mxu0 0.0
        %395 = vmatpush1.msra.mxu0 0.0
        %396 = vmatprep.subr.mxu0 0.0
        %397 = vmatpush1.msra.mxu0 0.0
        %398 = vmatprep.subr.mxu0 0.0
        %399 = vmatpush1.msra.mxu0 0.0
        %400 = vmatprep.subr.mxu0 0.0
        %401 = vmatpush1.msra.mxu0 0.0
        %402 = vmatprep.subr.mxu0 0.0
        %403 = vmatpush1.msra.mxu0 0.0
        %404 = vmatprep.subr.mxu0 0.0
        %405 = vmatpush1.msra.mxu0 0.0
        %406 = vmatprep.subr.mxu0 0.0
        %407 = vmatpush1.msra.mxu0 0.0
        %408 = vmatprep.subr.mxu0 0.0
        %409 = vmatpush1.msra.mxu0 0.0
        %410 = vmatprep.subr.mxu0 0.0
        %411 = vmatpush1.msra.mxu0 0.0
        %412 = vmatprep.subr.mxu0 0.0
        %413 = vmatpush1.msra.mxu0 0.0
        %414 = vmatprep.subr.mxu0 0.0
        %415 = vmatpush1.msra.mxu0 0.0
        %416 = vmatprep.subr.mxu0 0.0
        %417 = vmatpush1.msra.mxu0 0.0
        %418 = vmatprep.mubr.f32.mxu0 0.0
        %v419 = vand.u32 %v345, 4294901760
        %v420 = vsub.f32 %v345, %v419
        %v421 = vand.u32 %v420, 4294901760
        %v422 = vsub.f32 %v420, %v421
        %v423 = vand.u32 %v422, 4294901760
        %424 = vmatmul.mubr.f32.gmra.mrb[0].mxu0 %v423
        %v425 = vpop.f32.mrb[0].mxu0
        %v426 = vadd.f32 %v337, %v425
        %v427 = vpop.f32.mrb[0].mxu0
        %v428 = vadd.f32 %v337, %v427
        %429 = vmatprep.mubr.f32.mxu0 0.0
        %v430 = vand.u32 %v348, 4294901760
        %v431 = vsub.f32 %v348, %v430
        %v432 = vand.u32 %v431, 4294901760
        %v433 = vsub.f32 %v431, %v432
        %v434 = vand.u32 %v433, 4294901760
        %435 = vmatmul.mubr.f32.gmra.mrb[0].mxu0 %v434
        %v436 = vpop.f32.mrb[0].mxu0
        %v437 = vadd.f32 %v341, %v436
        %v438 = vpop.f32.mrb[0].mxu0
        %v439 = vadd.f32 %v341, %v438
        %440 = vdwg.mxu0
        %v441 = vand.u32 %v324, 4294901760
        %v442 = vsub.f32 %v324, %v441
        %v443 = vand.u32 %v442, 4294901760
        %v444 = vsub.f32 %v442, %v443
        %v445 = vand.u32 %v444, 4294901760
        %446 = vmatprep.subr.mxu0 %v445
        %v447 = vand.u32 %v323, 4294901760
        %v448 = vsub.f32 %v323, %v447
        %v449 = vand.u32 %v448, 4294901760
        %v450 = vsub.f32 %v448, %v449
        %v451 = vand.u32 %v450, 4294901760
        %452 = vmatpush1.msra.mxu0 %v451
        %v453 = vand.u32 %v328, 4294901760
        %v454 = vsub.f32 %v328, %v453
        %v455 = vand.u32 %v454, 4294901760
        %v456 = vsub.f32 %v454, %v455
        %v457 = vand.u32 %v456, 4294901760
        %458 = vmatprep.subr.mxu0 %v457
        %v459 = vand.u32 %v327, 4294901760
        %v460 = vsub.f32 %v327, %v459
        %v461 = vand.u32 %v460, 4294901760
        %v462 = vsub.f32 %v460, %v461
        %v463 = vand.u32 %v462, 4294901760
        %464 = vmatpush1.msra.mxu0 %v463
        %465 = vmatprep.subr.mxu0 0.0
        %466 = vmatpush1.msra.mxu0 0.0
        %467 = vmatprep.subr.mxu0 0.0
        %468 = vmatpush1.msra.mxu0 0.0
        %469 = vmatprep.subr.mxu0 0.0
        %470 = vmatpush1.msra.mxu0 0.0
        %471 = vmatprep.subr.mxu0 0.0
        %472 = vmatpush1.msra.mxu0 0.0
        %473 = vmatprep.subr.mxu0 0.0
        %474 = vmatpush1.msra.mxu0 0.0
        %475 = vmatprep.subr.mxu0 0.0
        %476 = vmatpush1.msra.mxu0 0.0
        %477 = vmatprep.subr.mxu0 0.0
        %478 = vmatpush1.msra.mxu0 0.0
        %479 = vmatprep.subr.mxu0 0.0
        %480 = vmatpush1.msra.mxu0 0.0
        %481 = vmatprep.subr.mxu0 0.0
        %482 = vmatpush1.msra.mxu0 0.0
        %483 = vmatprep.subr.mxu0 0.0
        %484 = vmatpush1.msra.mxu0 0.0
        %485 = vmatprep.subr.mxu0 0.0
        %486 = vmatpush1.msra.mxu0 0.0
        %487 = vmatprep.subr.mxu0 0.0
        %488 = vmatpush1.msra.mxu0 0.0
        %489 = vmatprep.subr.mxu0 0.0
        %490 = vmatpush1.msra.mxu0 0.0
        %491 = vmatprep.subr.mxu0 0.0
        %492 = vmatpush1.msra.mxu0 0.0
        %493 = vmatprep.subr.mxu0 0.0
        %494 = vmatpush1.msra.mxu0 0.0
        %495 = vmatprep.subr.mxu0 0.0
        %496 = vmatpush1.msra.mxu0 0.0
        %497 = vmatprep.subr.mxu0 0.0
        %498 = vmatpush1.msra.mxu0 0.0
        %499 = vmatprep.subr.mxu0 0.0
        %500 = vmatpush1.msra.mxu0 0.0
        %501 = vmatprep.subr.mxu0 0.0
        %502 = vmatpush1.msra.mxu0 0.0
        %503 = vmatprep.subr.mxu0 0.0
        %504 = vmatpush1.msra.mxu0 0.0
        %505 = vmatprep.subr.mxu0 0.0
        %506 = vmatpush1.msra.mxu0 0.0
        %507 = vmatprep.subr.mxu0 0.0
        %508 = vmatpush1.msra.mxu0 0.0
        %509 = vmatprep.subr.mxu0 0.0
        %510 = vmatpush1.msra.mxu0 0.0
        %511 = vmatprep.subr.mxu0 0.0
        %512 = vmatpush1.msra.mxu0 0.0
        %513 = vmatprep.subr.mxu0 0.0
        %514 = vmatpush1.msra.mxu0 0.0
        %515 = vmatprep.subr.mxu0 0.0
        %516 = vmatpush1.msra.mxu0 0.0
        %517 = vmatprep.subr.mxu0 0.0
        %518 = vmatpush1.msra.mxu0 0.0
        %519 = vmatprep.subr.mxu0 0.0
        %520 = vmatpush1.msra.mxu0 0.0
        %521 = vmatprep.subr.mxu0 0.0
        %522 = vmatpush1.msra.mxu0 0.0
        %523 = vmatprep.subr.mxu0 0.0
        %524 = vmatpush1.msra.mxu0 0.0
        %525 = vmatprep.mubr.f32.mxu0 0.0
        %v526 = vand.u32 %v345, 4294901760
        %527 = vmatmul.mubr.f32.gmra.mrb[0].mxu0 %v526
        %v528 = vpop.f32.mrb[0].mxu0
        %v529 = vadd.f32 %v426, %v528
        %v530 = vpop.f32.mrb[0].mxu0
        %v531 = vadd.f32 %v428, %v530
        %532 = vmatprep.mubr.f32.mxu0 0.0
        %v533 = vand.u32 %v348, 4294901760
        %534 = vmatmul.mubr.f32.gmra.mrb[0].mxu0 %v533
        %v535 = vpop.f32.mrb[0].mxu0
        %v536 = vadd.f32 %v437, %v535
        %v537 = vpop.f32.mrb[0].mxu0
        %v538 = vadd.f32 %v439, %v537
        %539 = vdwg.mxu0
        %v540 = vand.u32 %v324, 4294901760
        %v541 = vsub.f32 %v324, %v540
        %542 = vmatprep.subr.mxu0 %v541
        %v543 = vand.u32 %v323, 4294901760
        %v544 = vsub.f32 %v323, %v543
        %545 = vmatpush1.msra.mxu0 %v544
        %v546 = vand.u32 %v328, 4294901760
        %v547 = vsub.f32 %v328, %v546
        %548 = vmatprep.subr.mxu0 %v547
        %v549 = vand.u32 %v327, 4294901760
        %v550 = vsub.f32 %v327, %v549
        %551 = vmatpush1.msra.mxu0 %v550
        %552 = vmatprep.subr.mxu0 0.0
        %553 = vmatpush1.msra.mxu0 0.0
        %554 = vmatprep.subr.mxu0 0.0
        %555 = vmatpush1.msra.mxu0 0.0
        %556 = vmatprep.subr.mxu0 0.0
        %557 = vmatpush1.msra.mxu0 0.0
        %558 = vmatprep.subr.mxu0 0.0
        %559 = vmatpush1.msra.mxu0 0.0
        %560 = vmatprep.subr.mxu0 0.0
        %561 = vmatpush1.msra.mxu0 0.0
        %562 = vmatprep.subr.mxu0 0.0
        %563 = vmatpush1.msra.mxu0 0.0
        %564 = vmatprep.subr.mxu0 0.0
        %565 = vmatpush1.msra.mxu0 0.0
        %566 = vmatprep.subr.mxu0 0.0
        %567 = vmatpush1.msra.mxu0 0.0
        %568 = vmatprep.subr.mxu0 0.0
        %569 = vmatpush1.msra.mxu0 0.0
        %570 = vmatprep.subr.mxu0 0.0
        %571 = vmatpush1.msra.mxu0 0.0
        %572 = vmatprep.subr.mxu0 0.0
        %573 = vmatpush1.msra.mxu0 0.0
        %574 = vmatprep.subr.mxu0 0.0
        %575 = vmatpush1.msra.mxu0 0.0
        %576 = vmatprep.subr.mxu0 0.0
        %577 = vmatpush1.msra.mxu0 0.0
        %578 = vmatprep.subr.mxu0 0.0
        %579 = vmatpush1.msra.mxu0 0.0
        %580 = vmatprep.subr.mxu0 0.0
        %581 = vmatpush1.msra.mxu0 0.0
        %582 = vmatprep.subr.mxu0 0.0
        %583 = vmatpush1.msra.mxu0 0.0
        %584 = vmatprep.subr.mxu0 0.0
        %585 = vmatpush1.msra.mxu0 0.0
        %586 = vmatprep.subr.mxu0 0.0
        %587 = vmatpush1.msra.mxu0 0.0
        %588 = vmatprep.subr.mxu0 0.0
        %589 = vmatpush1.msra.mxu0 0.0
        %590 = vmatprep.subr.mxu0 0.0
        %591 = vmatpush1.msra.mxu0 0.0
        %592 = vmatprep.subr.mxu0 0.0
        %593 = vmatpush1.msra.mxu0 0.0
        %594 = vmatprep.subr.mxu0 0.0
        %595 = vmatpush1.msra.mxu0 0.0
        %596 = vmatprep.subr.mxu0 0.0
        %597 = vmatpush1.msra.mxu0 0.0
        %598 = vmatprep.subr.mxu0 0.0
        %599 = vmatpush1.msra.mxu0 0.0
        %600 = vmatprep.subr.mxu0 0.0
        %601 = vmatpush1.msra.mxu0 0.0
        %602 = vmatprep.subr.mxu0 0.0
        %603 = vmatpush1.msra.mxu0 0.0
        %604 = vmatprep.subr.mxu0 0.0
        %605 = vmatpush1.msra.mxu0 0.0
        %606 = vmatprep.subr.mxu0 0.0
        %607 = vmatpush1.msra.mxu0 0.0
        %608 = vmatprep.subr.mxu0 0.0
        %609 = vmatpush1.msra.mxu0 0.0
        %610 = vmatprep.subr.mxu0 0.0
        %611 = vmatpush1.msra.mxu0 0.0
        %612 = vmatprep.mubr.f32.mxu0 0.0
        %v613 = vand.u32 %v345, 4294901760
        %v614 = vsub.f32 %v345, %v613
        %615 = vmatmul.mubr.f32.gmra.mrb[0].mxu0 %v614
        %v616 = vpop.f32.mrb[0].mxu0
        %v617 = vadd.f32 %v529, %v616
        %v618 = vpop.f32.mrb[0].mxu0
        %v619 = vadd.f32 %v531, %v618
        %620 = vmatprep.mubr.f32.mxu0 0.0
        %v621 = vand.u32 %v348, 4294901760
        %v622 = vsub.f32 %v348, %v621
        %623 = vmatmul.mubr.f32.gmra.mrb[0].mxu0 %v622
        %v624 = vpop.f32.mrb[0].mxu0
        %v625 = vadd.f32 %v536, %v624
        %v626 = vpop.f32.mrb[0].mxu0
        %v627 = vadd.f32 %v538, %v626
        %628 = vdwg.mxu0
        %v629 = vand.u32 %v324, 4294901760
        %630 = vmatprep.subr.mxu0 %v629
        %v631 = vand.u32 %v323, 4294901760
        %632 = vmatpush1.msra.mxu0 %v631
        %v633 = vand.u32 %v328, 4294901760
        %634 = vmatprep.subr.mxu0 %v633
        %v635 = vand.u32 %v327, 4294901760
        %636 = vmatpush1.msra.mxu0 %v635
        %637 = vmatprep.subr.mxu0 0.0
        %638 = vmatpush1.msra.mxu0 0.0
        %639 = vmatprep.subr.mxu0 0.0
        %640 = vmatpush1.msra.mxu0 0.0
        %641 = vmatprep.subr.mxu0 0.0
        %642 = vmatpush1.msra.mxu0 0.0
        %643 = vmatprep.subr.mxu0 0.0
        %644 = vmatpush1.msra.mxu0 0.0
        %645 = vmatprep.subr.mxu0 0.0
        %646 = vmatpush1.msra.mxu0 0.0
        %647 = vmatprep.subr.mxu0 0.0
        %648 = vmatpush1.msra.mxu0 0.0
        %649 = vmatprep.subr.mxu0 0.0
        %650 = vmatpush1.msra.mxu0 0.0
        %651 = vmatprep.subr.mxu0 0.0
        %652 = vmatpush1.msra.mxu0 0.0
        %653 = vmatprep.subr.mxu0 0.0
        %654 = vmatpush1.msra.mxu0 0.0
        %655 = vmatprep.subr.mxu0 0.0
        %656 = vmatpush1.msra.mxu0 0.0
        %657 = vmatprep.subr.mxu0 0.0
        %658 = vmatpush1.msra.mxu0 0.0
        %659 = vmatprep.subr.mxu0 0.0
        %660 = vmatpush1.msra.mxu0 0.0
        %661 = vmatprep.subr.mxu0 0.0
        %662 = vmatpush1.msra.mxu0 0.0
        %663 = vmatprep.subr.mxu0 0.0
        %664 = vmatpush1.msra.mxu0 0.0
        %665 = vmatprep.subr.mxu0 0.0
        %666 = vmatpush1.msra.mxu0 0.0
        %667 = vmatprep.subr.mxu0 0.0
        %668 = vmatpush1.msra.mxu0 0.0
        %669 = vmatprep.subr.mxu0 0.0
        %670 = vmatpush1.msra.mxu0 0.0
        %671 = vmatprep.subr.mxu0 0.0
        %672 = vmatpush1.msra.mxu0 0.0
        %673 = vmatprep.subr.mxu0 0.0
        %674 = vmatpush1.msra.mxu0 0.0
        %675 = vmatprep.subr.mxu0 0.0
        %676 = vmatpush1.msra.mxu0 0.0
        %677 = vmatprep.subr.mxu0 0.0
        %678 = vmatpush1.msra.mxu0 0.0
        %679 = vmatprep.subr.mxu0 0.0
        %680 = vmatpush1.msra.mxu0 0.0
        %681 = vmatprep.subr.mxu0 0.0
        %682 = vmatpush1.msra.mxu0 0.0
        %683 = vmatprep.subr.mxu0 0.0
        %684 = vmatpush1.msra.mxu0 0.0
        %685 = vmatprep.subr.mxu0 0.0
        %686 = vmatpush1.msra.mxu0 0.0
        %687 = vmatprep.subr.mxu0 0.0
        %688 = vmatpush1.msra.mxu0 0.0
        %689 = vmatprep.subr.mxu0 0.0
        %690 = vmatpush1.msra.mxu0 0.0
        %691 = vmatprep.subr.mxu0 0.0
        %692 = vmatpush1.msra.mxu0 0.0
        %693 = vmatprep.subr.mxu0 0.0
        %694 = vmatpush1.msra.mxu0 0.0
        %695 = vmatprep.subr.mxu0 0.0
        %696 = vmatpush1.msra.mxu0 0.0
        %697 = vmatprep.mubr.f32.mxu0 0.0
        %v698 = vand.u32 %v345, 4294901760
        %v699 = vsub.f32 %v345, %v698
        %v700 = vand.u32 %v699, 4294901760
        %701 = vmatmul.mubr.f32.gmra.mrb[0].mxu0 %v700
        %v702 = vpop.f32.mrb[0].mxu0
        %v703 = vadd.f32 %v617, %v702
        %v704 = vpop.f32.mrb[0].mxu0
        %v705 = vadd.f32 %v619, %v704
        %706 = vmatprep.mubr.f32.mxu0 0.0
        %v707 = vand.u32 %v348, 4294901760
        %v708 = vsub.f32 %v348, %v707
        %v709 = vand.u32 %v708, 4294901760
        %710 = vmatmul.mubr.f32.gmra.mrb[0].mxu0 %v709
        %v711 = vpop.f32.mrb[0].mxu0
        %v712 = vadd.f32 %v625, %v711
        %v713 = vpop.f32.mrb[0].mxu0
        %v714 = vadd.f32 %v627, %v713
        %715 = vdwg.mxu0
        %v716 = vand.u32 %v324, 4294901760
        %v717 = vsub.f32 %v324, %v716
        %v718 = vand.u32 %v717, 4294901760
        %719 = vmatprep.subr.mxu0 %v718
        %v720 = vand.u32 %v323, 4294901760
        %v721 = vsub.f32 %v323, %v720
        %v722 = vand.u32 %v721, 4294901760
        %723 = vmatpush1.msra.mxu0 %v722
        %v724 = vand.u32 %v328, 4294901760
        %v725 = vsub.f32 %v328, %v724
        %v726 = vand.u32 %v725, 4294901760
        %727 = vmatprep.subr.mxu0 %v726
        %v728 = vand.u32 %v327, 4294901760
        %v729 = vsub.f32 %v327, %v728
        %v730 = vand.u32 %v729, 4294901760
        %731 = vmatpush1.msra.mxu0 %v730
        %732 = vmatprep.subr.mxu0 0.0
        %733 = vmatpush1.msra.mxu0 0.0
        %734 = vmatprep.subr.mxu0 0.0
        %735 = vmatpush1.msra.mxu0 0.0
        %736 = vmatprep.subr.mxu0 0.0
        %737 = vmatpush1.msra.mxu0 0.0
        %738 = vmatprep.subr.mxu0 0.0
        %739 = vmatpush1.msra.mxu0 0.0
        %740 = vmatprep.subr.mxu0 0.0
        %741 = vmatpush1.msra.mxu0 0.0
        %742 = vmatprep.subr.mxu0 0.0
        %743 = vmatpush1.msra.mxu0 0.0
        %744 = vmatprep.subr.mxu0 0.0
        %745 = vmatpush1.msra.mxu0 0.0
        %746 = vmatprep.subr.mxu0 0.0
        %747 = vmatpush1.msra.mxu0 0.0
        %748 = vmatprep.subr.mxu0 0.0
        %749 = vmatpush1.msra.mxu0 0.0
        %750 = vmatprep.subr.mxu0 0.0
        %751 = vmatpush1.msra.mxu0 0.0
        %752 = vmatprep.subr.mxu0 0.0
        %753 = vmatpush1.msra.mxu0 0.0
        %754 = vmatprep.subr.mxu0 0.0
        %755 = vmatpush1.msra.mxu0 0.0
        %756 = vmatprep.subr.mxu0 0.0
        %757 = vmatpush1.msra.mxu0 0.0
        %758 = vmatprep.subr.mxu0 0.0
        %759 = vmatpush1.msra.mxu0 0.0
        %760 = vmatprep.subr.mxu0 0.0
        %761 = vmatpush1.msra.mxu0 0.0
        %762 = vmatprep.subr.mxu0 0.0
        %763 = vmatpush1.msra.mxu0 0.0
        %764 = vmatprep.subr.mxu0 0.0
        %765 = vmatpush1.msra.mxu0 0.0
        %766 = vmatprep.subr.mxu0 0.0
        %767 = vmatpush1.msra.mxu0 0.0
        %768 = vmatprep.subr.mxu0 0.0
        %769 = vmatpush1.msra.mxu0 0.0
        %770 = vmatprep.subr.mxu0 0.0
        %771 = vmatpush1.msra.mxu0 0.0
        %772 = vmatprep.subr.mxu0 0.0
        %773 = vmatpush1.msra.mxu0 0.0
        %774 = vmatprep.subr.mxu0 0.0
        %775 = vmatpush1.msra.mxu0 0.0
        %776 = vmatprep.subr.mxu0 0.0
        %777 = vmatpush1.msra.mxu0 0.0
        %778 = vmatprep.subr.mxu0 0.0
        %779 = vmatpush1.msra.mxu0 0.0
        %780 = vmatprep.subr.mxu0 0.0
        %781 = vmatpush1.msra.mxu0 0.0
        %782 = vmatprep.subr.mxu0 0.0
        %783 = vmatpush1.msra.mxu0 0.0
        %784 = vmatprep.subr.mxu0 0.0
        %785 = vmatpush1.msra.mxu0 0.0
        %786 = vmatprep.subr.mxu0 0.0
        %787 = vmatpush1.msra.mxu0 0.0
        %788 = vmatprep.subr.mxu0 0.0
        %789 = vmatpush1.msra.mxu0 0.0
        %790 = vmatprep.subr.mxu0 0.0
        %791 = vmatpush1.msra.mxu0 0.0
        %792 = vmatprep.mubr.f32.mxu0 0.0
        %v793 = vand.u32 %v345, 4294901760
        %794 = vmatmul.mubr.f32.gmra.mrb[0].mxu0 %v793
        %v795 = vpop.f32.mrb[0].mxu0
        %v796 = vadd.f32 %v703, %v795
        %v797 = vpop.f32.mrb[0].mxu0
        %v798 = vadd.f32 %v705, %v797
        %799 = vmatprep.mubr.f32.mxu0 0.0
        %v800 = vand.u32 %v348, 4294901760
        %801 = vmatmul.mubr.f32.gmra.mrb[0].mxu0 %v800
        %v802 = vpop.f32.mrb[0].mxu0
        %v803 = vadd.f32 %v712, %v802
        %v804 = vpop.f32.mrb[0].mxu0
        %v805 = vadd.f32 %v714, %v804
        %806 = vdwg.mxu0
        %v807 = vand.u32 %v324, 4294901760
        %808 = vmatprep.subr.mxu0 %v807
        %v809 = vand.u32 %v323, 4294901760
        %810 = vmatpush1.msra.mxu0 %v809
        %v811 = vand.u32 %v328, 4294901760
        %812 = vmatprep.subr.mxu0 %v811
        %v813 = vand.u32 %v327, 4294901760
        %814 = vmatpush1.msra.mxu0 %v813
        %815 = vmatprep.subr.mxu0 0.0
        %816 = vmatpush1.msra.mxu0 0.0
        %817 = vmatprep.subr.mxu0 0.0
        %818 = vmatpush1.msra.mxu0 0.0
        %819 = vmatprep.subr.mxu0 0.0
        %820 = vmatpush1.msra.mxu0 0.0
        %821 = vmatprep.subr.mxu0 0.0
        %822 = vmatpush1.msra.mxu0 0.0
        %823 = vmatprep.subr.mxu0 0.0
        %824 = vmatpush1.msra.mxu0 0.0
        %825 = vmatprep.subr.mxu0 0.0
        %826 = vmatpush1.msra.mxu0 0.0
        %827 = vmatprep.subr.mxu0 0.0
        %828 = vmatpush1.msra.mxu0 0.0
        %829 = vmatprep.subr.mxu0 0.0
        %830 = vmatpush1.msra.mxu0 0.0
        %831 = vmatprep.subr.mxu0 0.0
        %832 = vmatpush1.msra.mxu0 0.0
        %833 = vmatprep.subr.mxu0 0.0
        %834 = vmatpush1.msra.mxu0 0.0
        %835 = vmatprep.subr.mxu0 0.0
        %836 = vmatpush1.msra.mxu0 0.0
        %837 = vmatprep.subr.mxu0 0.0
        %838 = vmatpush1.msra.mxu0 0.0
        %839 = vmatprep.subr.mxu0 0.0
        %840 = vmatpush1.msra.mxu0 0.0
        %841 = vmatprep.subr.mxu0 0.0
        %842 = vmatpush1.msra.mxu0 0.0
        %843 = vmatprep.subr.mxu0 0.0
        %844 = vmatpush1.msra.mxu0 0.0
        %845 = vmatprep.subr.mxu0 0.0
        %846 = vmatpush1.msra.mxu0 0.0
        %847 = vmatprep.subr.mxu0 0.0
        %848 = vmatpush1.msra.mxu0 0.0
        %849 = vmatprep.subr.mxu0 0.0
        %850 = vmatpush1.msra.mxu0 0.0
        %851 = vmatprep.subr.mxu0 0.0
        %852 = vmatpush1.msra.mxu0 0.0
        %853 = vmatprep.subr.mxu0 0.0
        %854 = vmatpush1.msra.mxu0 0.0
        %855 = vmatprep.subr.mxu0 0.0
        %856 = vmatpush1.msra.mxu0 0.0
        %857 = vmatprep.subr.mxu0 0.0
        %858 = vmatpush1.msra.mxu0 0.0
        %859 = vmatprep.subr.mxu0 0.0
        %860 = vmatpush1.msra.mxu0 0.0
        %861 = vmatprep.subr.mxu0 0.0
        %862 = vmatpush1.msra.mxu0 0.0
        %863 = vmatprep.subr.mxu0 0.0
        %864 = vmatpush1.msra.mxu0 0.0
        %865 = vmatprep.subr.mxu0 0.0
        %866 = vmatpush1.msra.mxu0 0.0
        %867 = vmatprep.subr.mxu0 0.0
        %868 = vmatpush1.msra.mxu0 0.0
        %869 = vmatprep.subr.mxu0 0.0
        %870 = vmatpush1.msra.mxu0 0.0
        %871 = vmatprep.subr.mxu0 0.0
        %872 = vmatpush1.msra.mxu0 0.0
        %873 = vmatprep.subr.mxu0 0.0
        %874 = vmatpush1.msra.mxu0 0.0
        %875 = vmatprep.mubr.f32.mxu0 0.0
        %v876 = vand.u32 %v345, 4294901760
        %877 = vmatmul.mubr.f32.gmra.mrb[0].mxu0 %v876
        %v878 = vpop.f32.mrb[0].mxu0
        %v879 = vadd.f32 %v796, %v878
        %v880 = vpop.f32.mrb[0].mxu0
        %v881 = vadd.f32 %v798, %v880
        %882 = vmatprep.mubr.f32.mxu0 0.0
        %v883 = vand.u32 %v348, 4294901760
        %884 = vmatmul.mubr.f32.gmra.mrb[0].mxu0 %v883
        %v885 = vpop.f32.mrb[0].mxu0
        %v886 = vadd.f32 %v803, %v885
        %v887 = vpop.f32.mrb[0].mxu0
        %v888 = vadd.f32 %v805, %v887
        %889 = vdwg.mxu0
        %v890 = vand.u32 %v326, 4294901760
        %891 = vmatprep.subr.mxu0 %v890
        %v892 = vand.u32 %v325, 4294901760
        %893 = vmatpush1.msra.mxu0 %v892
        %v894 = vand.u32 %v330, 4294901760
        %895 = vmatprep.subr.mxu0 %v894
        %v896 = vand.u32 %v329, 4294901760
        %897 = vmatpush1.msra.mxu0 %v896
        %898 = vmatprep.subr.mxu0 0.0
        %899 = vmatpush1.msra.mxu0 0.0
        %900 = vmatprep.subr.mxu0 0.0
        %901 = vmatpush1.msra.mxu0 0.0
        %902 = vmatprep.subr.mxu0 0.0
        %903 = vmatpush1.msra.mxu0 0.0
        %904 = vmatprep.subr.mxu0 0.0
        %905 = vmatpush1.msra.mxu0 0.0
        %906 = vmatprep.subr.mxu0 0.0
        %907 = vmatpush1.msra.mxu0 0.0
        %908 = vmatprep.subr.mxu0 0.0
        %909 = vmatpush1.msra.mxu0 0.0
        %910 = vmatprep.subr.mxu0 0.0
        %911 = vmatpush1.msra.mxu0 0.0
        %912 = vmatprep.subr.mxu0 0.0
        %913 = vmatpush1.msra.mxu0 0.0
        %914 = vmatprep.subr.mxu0 0.0
        %915 = vmatpush1.msra.mxu0 0.0
        %916 = vmatprep.subr.mxu0 0.0
        %917 = vmatpush1.msra.mxu0 0.0
        %918 = vmatprep.subr.mxu0 0.0
        %919 = vmatpush1.msra.mxu0 0.0
        %920 = vmatprep.subr.mxu0 0.0
        %921 = vmatpush1.msra.mxu0 0.0
        %922 = vmatprep.subr.mxu0 0.0
        %923 = vmatpush1.msra.mxu0 0.0
        %924 = vmatprep.subr.mxu0 0.0
        %925 = vmatpush1.msra.mxu0 0.0
        %926 = vmatprep.subr.mxu0 0.0
        %927 = vmatpush1.msra.mxu0 0.0
        %928 = vmatprep.subr.mxu0 0.0
        %929 = vmatpush1.msra.mxu0 0.0
        %930 = vmatprep.subr.mxu0 0.0
        %931 = vmatpush1.msra.mxu0 0.0
        %932 = vmatprep.subr.mxu0 0.0
        %933 = vmatpush1.msra.mxu0 0.0
        %934 = vmatprep.subr.mxu0 0.0
        %935 = vmatpush1.msra.mxu0 0.0
        %936 = vmatprep.subr.mxu0 0.0
        %937 = vmatpush1.msra.mxu0 0.0
        %938 = vmatprep.subr.mxu0 0.0
        %939 = vmatpush1.msra.mxu0 0.0
        %940 = vmatprep.subr.mxu0 0.0
        %941 = vmatpush1.msra.mxu0 0.0
        %942 = vmatprep.subr.mxu0 0.0
        %943 = vmatpush1.msra.mxu0 0.0
        %944 = vmatprep.subr.mxu0 0.0
        %945 = vmatpush1.msra.mxu0 0.0
        %946 = vmatprep.subr.mxu0 0.0
        %947 = vmatpush1.msra.mxu0 0.0
        %948 = vmatprep.subr.mxu0 0.0
        %949 = vmatpush1.msra.mxu0 0.0
        %950 = vmatprep.subr.mxu0 0.0
        %951 = vmatpush1.msra.mxu0 0.0
        %952 = vmatprep.subr.mxu0 0.0
        %953 = vmatpush1.msra.mxu0 0.0
        %954 = vmatprep.subr.mxu0 0.0
        %955 = vmatpush1.msra.mxu0 0.0
        %956 = vmatprep.subr.mxu0 0.0
        %957 = vmatpush1.msra.mxu0 0.0
        %958 = vmatprep.mubr.f32.mxu0 0.0
        %v959 = vand.u32 %v345, 4294901760
        %v960 = vsub.f32 %v345, %v959
        %v961 = vand.u32 %v960, 4294901760
        %v962 = vsub.f32 %v960, %v961
        %v963 = vand.u32 %v962, 4294901760
        %964 = vmatmul.mubr.f32.gmra.mrb[0].mxu0 %v963
        %v965 = vpop.f32.mrb[0].mxu0
        %v966 = vadd.f32 %v337, %v965
        %v967 = vpop.f32.mrb[0].mxu0
        %v968 = vadd.f32 %v337, %v967
        %969 = vmatprep.mubr.f32.mxu0 0.0
        %v970 = vand.u32 %v348, 4294901760
        %v971 = vsub.f32 %v348, %v970
        %v972 = vand.u32 %v971, 4294901760
        %v973 = vsub.f32 %v971, %v972
        %v974 = vand.u32 %v973, 4294901760
        %975 = vmatmul.mubr.f32.gmra.mrb[0].mxu0 %v974
        %v976 = vpop.f32.mrb[0].mxu0
        %v977 = vadd.f32 %v341, %v976
        %v978 = vpop.f32.mrb[0].mxu0
        %v979 = vadd.f32 %v341, %v978
        %980 = vdwg.mxu0
        %v981 = vand.u32 %v326, 4294901760
        %v982 = vsub.f32 %v326, %v981
        %v983 = vand.u32 %v982, 4294901760
        %v984 = vsub.f32 %v982, %v983
        %v985 = vand.u32 %v984, 4294901760
        %986 = vmatprep.subr.mxu0 %v985
        %v987 = vand.u32 %v325, 4294901760
        %v988 = vsub.f32 %v325, %v987
        %v989 = vand.u32 %v988, 4294901760
        %v990 = vsub.f32 %v988, %v989
        %v991 = vand.u32 %v990, 4294901760
        %992 = vmatpush1.msra.mxu0 %v991
        %v993 = vand.u32 %v330, 4294901760
        %v994 = vsub.f32 %v330, %v993
        %v995 = vand.u32 %v994, 4294901760
        %v996 = vsub.f32 %v994, %v995
        %v997 = vand.u32 %v996, 4294901760
        %998 = vmatprep.subr.mxu0 %v997
        %v999 = vand.u32 %v329, 4294901760
        %v1000 = vsub.f32 %v329, %v999
        %v1001 = vand.u32 %v1000, 4294901760
        %v1002 = vsub.f32 %v1000, %v1001
        %v1003 = vand.u32 %v1002, 4294901760
        %1004 = vmatpush1.msra.mxu0 %v1003
        %1005 = vmatprep.subr.mxu0 0.0
        %1006 = vmatpush1.msra.mxu0 0.0
        %1007 = vmatprep.subr.mxu0 0.0
        %1008 = vmatpush1.msra.mxu0 0.0
        %1009 = vmatprep.subr.mxu0 0.0
        %1010 = vmatpush1.msra.mxu0 0.0
        %1011 = vmatprep.subr.mxu0 0.0
        %1012 = vmatpush1.msra.mxu0 0.0
        %1013 = vmatprep.subr.mxu0 0.0
        %1014 = vmatpush1.msra.mxu0 0.0
        %1015 = vmatprep.subr.mxu0 0.0
        %1016 = vmatpush1.msra.mxu0 0.0
        %1017 = vmatprep.subr.mxu0 0.0
        %1018 = vmatpush1.msra.mxu0 0.0
        %1019 = vmatprep.subr.mxu0 0.0
        %1020 = vmatpush1.msra.mxu0 0.0
        %1021 = vmatprep.subr.mxu0 0.0
        %1022 = vmatpush1.msra.mxu0 0.0
        %1023 = vmatprep.subr.mxu0 0.0
        %1024 = vmatpush1.msra.mxu0 0.0
        %1025 = vmatprep.subr.mxu0 0.0
        %1026 = vmatpush1.msra.mxu0 0.0
        %1027 = vmatprep.subr.mxu0 0.0
        %1028 = vmatpush1.msra.mxu0 0.0
        %1029 = vmatprep.subr.mxu0 0.0
        %1030 = vmatpush1.msra.mxu0 0.0
        %1031 = vmatprep.subr.mxu0 0.0
        %1032 = vmatpush1.msra.mxu0 0.0
        %1033 = vmatprep.subr.mxu0 0.0
        %1034 = vmatpush1.msra.mxu0 0.0
        %1035 = vmatprep.subr.mxu0 0.0
        %1036 = vmatpush1.msra.mxu0 0.0
        %1037 = vmatprep.subr.mxu0 0.0
        %1038 = vmatpush1.msra.mxu0 0.0
        %1039 = vmatprep.subr.mxu0 0.0
        %1040 = vmatpush1.msra.mxu0 0.0
        %1041 = vmatprep.subr.mxu0 0.0
        %1042 = vmatpush1.msra.mxu0 0.0
        %1043 = vmatprep.subr.mxu0 0.0
        %1044 = vmatpush1.msra.mxu0 0.0
        %1045 = vmatprep.subr.mxu0 0.0
        %1046 = vmatpush1.msra.mxu0 0.0
        %1047 = vmatprep.subr.mxu0 0.0
        %1048 = vmatpush1.msra.mxu0 0.0
        %1049 = vmatprep.subr.mxu0 0.0
        %1050 = vmatpush1.msra.mxu0 0.0
        %1051 = vmatprep.subr.mxu0 0.0
        %1052 = vmatpush1.msra.mxu0 0.0
        %1053 = vmatprep.subr.mxu0 0.0
        %1054 = vmatpush1.msra.mxu0 0.0
        %1055 = vmatprep.subr.mxu0 0.0
        %1056 = vmatpush1.msra.mxu0 0.0
        %1057 = vmatprep.subr.mxu0 0.0
        %1058 = vmatpush1.msra.mxu0 0.0
        %1059 = vmatprep.subr.mxu0 0.0
        %1060 = vmatpush1.msra.mxu0 0.0
        %1061 = vmatprep.subr.mxu0 0.0
        %1062 = vmatpush1.msra.mxu0 0.0
        %1063 = vmatprep.subr.mxu0 0.0
        %1064 = vmatpush1.msra.mxu0 0.0
        %1065 = vmatprep.mubr.f32.mxu0 0.0
        %v1066 = vand.u32 %v345, 4294901760
        %1067 = vmatmul.mubr.f32.gmra.mrb[0].mxu0 %v1066
        %v1068 = vpop.f32.mrb[0].mxu0
        %v1069 = vadd.f32 %v966, %v1068
        %v1070 = vpop.f32.mrb[0].mxu0
        %v1071 = vadd.f32 %v968, %v1070
        %1072 = vmatprep.mubr.f32.mxu0 0.0
        %v1073 = vand.u32 %v348, 4294901760
        %1074 = vmatmul.mubr.f32.gmra.mrb[0].mxu0 %v1073
        %v1075 = vpop.f32.mrb[0].mxu0
        %v1076 = vadd.f32 %v977, %v1075
        %v1077 = vpop.f32.mrb[0].mxu0
        %v1078 = vadd.f32 %v979, %v1077
        %1079 = vdwg.mxu0
        %v1080 = vand.u32 %v326, 4294901760
        %v1081 = vsub.f32 %v326, %v1080
        %1082 = vmatprep.subr.mxu0 %v1081
        %v1083 = vand.u32 %v325, 4294901760
        %v1084 = vsub.f32 %v325, %v1083
        %1085 = vmatpush1.msra.mxu0 %v1084
        %v1086 = vand.u32 %v330, 4294901760
        %v1087 = vsub.f32 %v330, %v1086
        %1088 = vmatprep.subr.mxu0 %v1087
        %v1089 = vand.u32 %v329, 4294901760
        %v1090 = vsub.f32 %v329, %v1089
        %1091 = vmatpush1.msra.mxu0 %v1090
        %1092 = vmatprep.subr.mxu0 0.0
        %1093 = vmatpush1.msra.mxu0 0.0
        %1094 = vmatprep.subr.mxu0 0.0
        %1095 = vmatpush1.msra.mxu0 0.0
        %1096 = vmatprep.subr.mxu0 0.0
        %1097 = vmatpush1.msra.mxu0 0.0
        %1098 = vmatprep.subr.mxu0 0.0
        %1099 = vmatpush1.msra.mxu0 0.0
        %1100 = vmatprep.subr.mxu0 0.0
        %1101 = vmatpush1.msra.mxu0 0.0
        %1102 = vmatprep.subr.mxu0 0.0
        %1103 = vmatpush1.msra.mxu0 0.0
        %1104 = vmatprep.subr.mxu0 0.0
        %1105 = vmatpush1.msra.mxu0 0.0
        %1106 = vmatprep.subr.mxu0 0.0
        %1107 = vmatpush1.msra.mxu0 0.0
        %1108 = vmatprep.subr.mxu0 0.0
        %1109 = vmatpush1.msra.mxu0 0.0
        %1110 = vmatprep.subr.mxu0 0.0
        %1111 = vmatpush1.msra.mxu0 0.0
        %1112 = vmatprep.subr.mxu0 0.0
        %1113 = vmatpush1.msra.mxu0 0.0
        %1114 = vmatprep.subr.mxu0 0.0
        %1115 = vmatpush1.msra.mxu0 0.0
        %1116 = vmatprep.subr.mxu0 0.0
        %1117 = vmatpush1.msra.mxu0 0.0
        %1118 = vmatprep.subr.mxu0 0.0
        %1119 = vmatpush1.msra.mxu0 0.0
        %1120 = vmatprep.subr.mxu0 0.0
        %1121 = vmatpush1.msra.mxu0 0.0
        %1122 = vmatprep.subr.mxu0 0.0
        %1123 = vmatpush1.msra.mxu0 0.0
        %1124 = vmatprep.subr.mxu0 0.0
        %1125 = vmatpush1.msra.mxu0 0.0
        %1126 = vmatprep.subr.mxu0 0.0
        %1127 = vmatpush1.msra.mxu0 0.0
        %1128 = vmatprep.subr.mxu0 0.0
        %1129 = vmatpush1.msra.mxu0 0.0
        %1130 = vmatprep.subr.mxu0 0.0
        %1131 = vmatpush1.msra.mxu0 0.0
        %1132 = vmatprep.subr.mxu0 0.0
        %1133 = vmatpush1.msra.mxu0 0.0
        %1134 = vmatprep.subr.mxu0 0.0
        %1135 = vmatpush1.msra.mxu0 0.0
        %1136 = vmatprep.subr.mxu0 0.0
        %1137 = vmatpush1.msra.mxu0 0.0
        %1138 = vmatprep.subr.mxu0 0.0
        %1139 = vmatpush1.msra.mxu0 0.0
        %1140 = vmatprep.subr.mxu0 0.0
        %1141 = vmatpush1.msra.mxu0 0.0
        %1142 = vmatprep.subr.mxu0 0.0
        %1143 = vmatpush1.msra.mxu0 0.0
        %1144 = vmatprep.subr.mxu0 0.0
        %1145 = vmatpush1.msra.mxu0 0.0
        %1146 = vmatprep.subr.mxu0 0.0
        %1147 = vmatpush1.msra.mxu0 0.0
        %1148 = vmatprep.subr.mxu0 0.0
        %1149 = vmatpush1.msra.mxu0 0.0
        %1150 = vmatprep.subr.mxu0 0.0
        %1151 = vmatpush1.msra.mxu0 0.0
        %1152 = vmatprep.mubr.f32.mxu0 0.0
        %v1153 = vand.u32 %v345, 4294901760
        %v1154 = vsub.f32 %v345, %v1153
        %1155 = vmatmul.mubr.f32.gmra.mrb[0].mxu0 %v1154
        %v1156 = vpop.f32.mrb[0].mxu0
        %v1157 = vadd.f32 %v1069, %v1156
        %v1158 = vpop.f32.mrb[0].mxu0
        %v1159 = vadd.f32 %v1071, %v1158
        %1160 = vmatprep.mubr.f32.mxu0 0.0
        %v1161 = vand.u32 %v348, 4294901760
        %v1162 = vsub.f32 %v348, %v1161
        %1163 = vmatmul.mubr.f32.gmra.mrb[0].mxu0 %v1162
        %v1164 = vpop.f32.mrb[0].mxu0
        %v1165 = vadd.f32 %v1076, %v1164
        %v1166 = vpop.f32.mrb[0].mxu0
        %v1167 = vadd.f32 %v1078, %v1166
        %1168 = vdwg.mxu0
        %v1169 = vand.u32 %v326, 4294901760
        %1170 = vmatprep.subr.mxu0 %v1169
        %v1171 = vand.u32 %v325, 4294901760
        %1172 = vmatpush1.msra.mxu0 %v1171
        %v1173 = vand.u32 %v330, 4294901760
        %1174 = vmatprep.subr.mxu0 %v1173
        %v1175 = vand.u32 %v329, 4294901760
        %1176 = vmatpush1.msra.mxu0 %v1175
        %1177 = vmatprep.subr.mxu0 0.0
        %1178 = vmatpush1.msra.mxu0 0.0
        %1179 = vmatprep.subr.mxu0 0.0
        %1180 = vmatpush1.msra.mxu0 0.0
        %1181 = vmatprep.subr.mxu0 0.0
        %1182 = vmatpush1.msra.mxu0 0.0
        %1183 = vmatprep.subr.mxu0 0.0
        %1184 = vmatpush1.msra.mxu0 0.0
        %1185 = vmatprep.subr.mxu0 0.0
        %1186 = vmatpush1.msra.mxu0 0.0
        %1187 = vmatprep.subr.mxu0 0.0
        %1188 = vmatpush1.msra.mxu0 0.0
        %1189 = vmatprep.subr.mxu0 0.0
        %1190 = vmatpush1.msra.mxu0 0.0
        %1191 = vmatprep.subr.mxu0 0.0
        %1192 = vmatpush1.msra.mxu0 0.0
        %1193 = vmatprep.subr.mxu0 0.0
        %1194 = vmatpush1.msra.mxu0 0.0
        %1195 = vmatprep.subr.mxu0 0.0
        %1196 = vmatpush1.msra.mxu0 0.0
        %1197 = vmatprep.subr.mxu0 0.0
        %1198 = vmatpush1.msra.mxu0 0.0
        %1199 = vmatprep.subr.mxu0 0.0
        %1200 = vmatpush1.msra.mxu0 0.0
        %1201 = vmatprep.subr.mxu0 0.0
        %1202 = vmatpush1.msra.mxu0 0.0
        %1203 = vmatprep.subr.mxu0 0.0
        %1204 = vmatpush1.msra.mxu0 0.0
        %1205 = vmatprep.subr.mxu0 0.0
        %1206 = vmatpush1.msra.mxu0 0.0
        %1207 = vmatprep.subr.mxu0 0.0
        %1208 = vmatpush1.msra.mxu0 0.0
        %1209 = vmatprep.subr.mxu0 0.0
        %1210 = vmatpush1.msra.mxu0 0.0
        %1211 = vmatprep.subr.mxu0 0.0
        %1212 = vmatpush1.msra.mxu0 0.0
        %1213 = vmatprep.subr.mxu0 0.0
        %1214 = vmatpush1.msra.mxu0 0.0
        %1215 = vmatprep.subr.mxu0 0.0
        %1216 = vmatpush1.msra.mxu0 0.0
        %1217 = vmatprep.subr.mxu0 0.0
        %1218 = vmatpush1.msra.mxu0 0.0
        %1219 = vmatprep.subr.mxu0 0.0
        %1220 = vmatpush1.msra.mxu0 0.0
        %1221 = vmatprep.subr.mxu0 0.0
        %1222 = vmatpush1.msra.mxu0 0.0
        %1223 = vmatprep.subr.mxu0 0.0
        %1224 = vmatpush1.msra.mxu0 0.0
        %1225 = vmatprep.subr.mxu0 0.0
        %1226 = vmatpush1.msra.mxu0 0.0
        %1227 = vmatprep.subr.mxu0 0.0
        %1228 = vmatpush1.msra.mxu0 0.0
        %1229 = vmatprep.subr.mxu0 0.0
        %1230 = vmatpush1.msra.mxu0 0.0
        %1231 = vmatprep.subr.mxu0 0.0
        %1232 = vmatpush1.msra.mxu0 0.0
        %1233 = vmatprep.subr.mxu0 0.0
        %1234 = vmatpush1.msra.mxu0 0.0
        %1235 = vmatprep.subr.mxu0 0.0
        %1236 = vmatpush1.msra.mxu0 0.0
        %1237 = vmatprep.mubr.f32.mxu0 0.0
        %v1238 = vand.u32 %v345, 4294901760
        %v1239 = vsub.f32 %v345, %v1238
        %v1240 = vand.u32 %v1239, 4294901760
        %1241 = vmatmul.mubr.f32.gmra.mrb[0].mxu0 %v1240
        %v1242 = vpop.f32.mrb[0].mxu0
        %v1243 = vadd.f32 %v1157, %v1242
        %v1244 = vpop.f32.mrb[0].mxu0
        %v1245 = vadd.f32 %v1159, %v1244
        %1246 = vmatprep.mubr.f32.mxu0 0.0
        %v1247 = vand.u32 %v348, 4294901760
        %v1248 = vsub.f32 %v348, %v1247
        %v1249 = vand.u32 %v1248, 4294901760
        %1250 = vmatmul.mubr.f32.gmra.mrb[0].mxu0 %v1249
        %v1251 = vpop.f32.mrb[0].mxu0
        %v1252 = vadd.f32 %v1165, %v1251
        %v1253 = vpop.f32.mrb[0].mxu0
        %v1254 = vadd.f32 %v1167, %v1253
        %1255 = vdwg.mxu0
        %v1256 = vand.u32 %v326, 4294901760
        %v1257 = vsub.f32 %v326, %v1256
        %v1258 = vand.u32 %v1257, 4294901760
        %1259 = vmatprep.subr.mxu0 %v1258
        %v1260 = vand.u32 %v325, 4294901760
        %v1261 = vsub.f32 %v325, %v1260
        %v1262 = vand.u32 %v1261, 4294901760
        %1263 = vmatpush1.msra.mxu0 %v1262
        %v1264 = vand.u32 %v330, 4294901760
        %v1265 = vsub.f32 %v330, %v1264
        %v1266 = vand.u32 %v1265, 4294901760
        %1267 = vmatprep.subr.mxu0 %v1266
        %v1268 = vand.u32 %v329, 4294901760
        %v1269 = vsub.f32 %v329, %v1268
        %v1270 = vand.u32 %v1269, 4294901760
        %1271 = vmatpush1.msra.mxu0 %v1270
        %1272 = vmatprep.subr.mxu0 0.0
        %1273 = vmatpush1.msra.mxu0 0.0
        %1274 = vmatprep.subr.mxu0 0.0
        %1275 = vmatpush1.msra.mxu0 0.0
        %1276 = vmatprep.subr.mxu0 0.0
        %1277 = vmatpush1.msra.mxu0 0.0
        %1278 = vmatprep.subr.mxu0 0.0
        %1279 = vmatpush1.msra.mxu0 0.0
        %1280 = vmatprep.subr.mxu0 0.0
        %1281 = vmatpush1.msra.mxu0 0.0
        %1282 = vmatprep.subr.mxu0 0.0
        %1283 = vmatpush1.msra.mxu0 0.0
        %1284 = vmatprep.subr.mxu0 0.0
        %1285 = vmatpush1.msra.mxu0 0.0
        %1286 = vmatprep.subr.mxu0 0.0
        %1287 = vmatpush1.msra.mxu0 0.0
        %1288 = vmatprep.subr.mxu0 0.0
        %1289 = vmatpush1.msra.mxu0 0.0
        %1290 = vmatprep.subr.mxu0 0.0
        %1291 = vmatpush1.msra.mxu0 0.0
        %1292 = vmatprep.subr.mxu0 0.0
        %1293 = vmatpush1.msra.mxu0 0.0
        %1294 = vmatprep.subr.mxu0 0.0
        %1295 = vmatpush1.msra.mxu0 0.0
        %1296 = vmatprep.subr.mxu0 0.0
        %1297 = vmatpush1.msra.mxu0 0.0
        %1298 = vmatprep.subr.mxu0 0.0
        %1299 = vmatpush1.msra.mxu0 0.0
        %1300 = vmatprep.subr.mxu0 0.0
        %1301 = vmatpush1.msra.mxu0 0.0
        %1302 = vmatprep.subr.mxu0 0.0
        %1303 = vmatpush1.msra.mxu0 0.0
        %1304 = vmatprep.subr.mxu0 0.0
        %1305 = vmatpush1.msra.mxu0 0.0
        %1306 = vmatprep.subr.mxu0 0.0
        %1307 = vmatpush1.msra.mxu0 0.0
        %1308 = vmatprep.subr.mxu0 0.0
        %1309 = vmatpush1.msra.mxu0 0.0
        %1310 = vmatprep.subr.mxu0 0.0
        %1311 = vmatpush1.msra.mxu0 0.0
        %1312 = vmatprep.subr.mxu0 0.0
        %1313 = vmatpush1.msra.mxu0 0.0
        %1314 = vmatprep.subr.mxu0 0.0
        %1315 = vmatpush1.msra.mxu0 0.0
        %1316 = vmatprep.subr.mxu0 0.0
        %1317 = vmatpush1.msra.mxu0 0.0
        %1318 = vmatprep.subr.mxu0 0.0
        %1319 = vmatpush1.msra.mxu0 0.0
        %1320 = vmatprep.subr.mxu0 0.0
        %1321 = vmatpush1.msra.mxu0 0.0
        %1322 = vmatprep.subr.mxu0 0.0
        %1323 = vmatpush1.msra.mxu0 0.0
        %1324 = vmatprep.subr.mxu0 0.0
        %1325 = vmatpush1.msra.mxu0 0.0
        %1326 = vmatprep.subr.mxu0 0.0
        %1327 = vmatpush1.msra.mxu0 0.0
        %1328 = vmatprep.subr.mxu0 0.0
        %1329 = vmatpush1.msra.mxu0 0.0
        %1330 = vmatprep.subr.mxu0 0.0
        %1331 = vmatpush1.msra.mxu0 0.0
        %1332 = vmatprep.mubr.f32.mxu0 0.0
        %v1333 = vand.u32 %v345, 4294901760
        %1334 = vmatmul.mubr.f32.gmra.mrb[0].mxu0 %v1333
        %v1335 = vpop.f32.mrb[0].mxu0
        %v1336 = vadd.f32 %v1243, %v1335
        %v1337 = vpop.f32.mrb[0].mxu0
        %v1338 = vadd.f32 %v1245, %v1337
        %1339 = vmatprep.mubr.f32.mxu0 0.0
        %v1340 = vand.u32 %v348, 4294901760
        %1341 = vmatmul.mubr.f32.gmra.mrb[0].mxu0 %v1340
        %v1342 = vpop.f32.mrb[0].mxu0
        %v1343 = vadd.f32 %v1252, %v1342
        %v1344 = vpop.f32.mrb[0].mxu0
        %v1345 = vadd.f32 %v1254, %v1344
        %1346 = vdwg.mxu0
        %v1347 = vand.u32 %v326, 4294901760
        %1348 = vmatprep.subr.mxu0 %v1347
        %v1349 = vand.u32 %v325, 4294901760
        %1350 = vmatpush1.msra.mxu0 %v1349
        %v1351 = vand.u32 %v330, 4294901760
        %1352 = vmatprep.subr.mxu0 %v1351
        %v1353 = vand.u32 %v329, 4294901760
        %1354 = vmatpush1.msra.mxu0 %v1353
        %1355 = vmatprep.subr.mxu0 0.0
        %1356 = vmatpush1.msra.mxu0 0.0
        %1357 = vmatprep.subr.mxu0 0.0
        %1358 = vmatpush1.msra.mxu0 0.0
        %1359 = vmatprep.subr.mxu0 0.0
        %1360 = vmatpush1.msra.mxu0 0.0
        %1361 = vmatprep.subr.mxu0 0.0
        %1362 = vmatpush1.msra.mxu0 0.0
        %1363 = vmatprep.subr.mxu0 0.0
        %1364 = vmatpush1.msra.mxu0 0.0
        %1365 = vmatprep.subr.mxu0 0.0
        %1366 = vmatpush1.msra.mxu0 0.0
        %1367 = vmatprep.subr.mxu0 0.0
        %1368 = vmatpush1.msra.mxu0 0.0
        %1369 = vmatprep.subr.mxu0 0.0
        %1370 = vmatpush1.msra.mxu0 0.0
        %1371 = vmatprep.subr.mxu0 0.0
        %1372 = vmatpush1.msra.mxu0 0.0
        %1373 = vmatprep.subr.mxu0 0.0
        %1374 = vmatpush1.msra.mxu0 0.0
        %1375 = vmatprep.subr.mxu0 0.0
        %1376 = vmatpush1.msra.mxu0 0.0
        %1377 = vmatprep.subr.mxu0 0.0
        %1378 = vmatpush1.msra.mxu0 0.0
        %1379 = vmatprep.subr.mxu0 0.0
        %1380 = vmatpush1.msra.mxu0 0.0
        %1381 = vmatprep.subr.mxu0 0.0
        %1382 = vmatpush1.msra.mxu0 0.0
        %1383 = vmatprep.subr.mxu0 0.0
        %1384 = vmatpush1.msra.mxu0 0.0
        %1385 = vmatprep.subr.mxu0 0.0
        %1386 = vmatpush1.msra.mxu0 0.0
        %1387 = vmatprep.subr.mxu0 0.0
        %1388 = vmatpush1.msra.mxu0 0.0
        %1389 = vmatprep.subr.mxu0 0.0
        %1390 = vmatpush1.msra.mxu0 0.0
        %1391 = vmatprep.subr.mxu0 0.0
        %1392 = vmatpush1.msra.mxu0 0.0
        %1393 = vmatprep.subr.mxu0 0.0
        %1394 = vmatpush1.msra.mxu0 0.0
        %1395 = vmatprep.subr.mxu0 0.0
        %1396 = vmatpush1.msra.mxu0 0.0
        %1397 = vmatprep.subr.mxu0 0.0
        %1398 = vmatpush1.msra.mxu0 0.0
        %1399 = vmatprep.subr.mxu0 0.0
        %1400 = vmatpush1.msra.mxu0 0.0
        %1401 = vmatprep.subr.mxu0 0.0
        %1402 = vmatpush1.msra.mxu0 0.0
        %1403 = vmatprep.subr.mxu0 0.0
        %1404 = vmatpush1.msra.mxu0 0.0
        %1405 = vmatprep.subr.mxu0 0.0
        %1406 = vmatpush1.msra.mxu0 0.0
        %1407 = vmatprep.subr.mxu0 0.0
        %1408 = vmatpush1.msra.mxu0 0.0
        %1409 = vmatprep.subr.mxu0 0.0
        %1410 = vmatpush1.msra.mxu0 0.0
        %1411 = vmatprep.subr.mxu0 0.0
        %1412 = vmatpush1.msra.mxu0 0.0
        %1413 = vmatprep.subr.mxu0 0.0
        %1414 = vmatpush1.msra.mxu0 0.0
        %1415 = vmatprep.mubr.f32.mxu0 0.0
        %v1416 = vand.u32 %v345, 4294901760
        %1417 = vmatmul.mubr.f32.gmra.mrb[0].mxu0 %v1416
        %v1418 = vpop.f32.mrb[0].mxu0
        %v1419 = vadd.f32 %v1336, %v1418
        %v1420 = vpop.f32.mrb[0].mxu0
        %v1421 = vadd.f32 %v1338, %v1420
        %1422 = vmatprep.mubr.f32.mxu0 0.0
        %v1423 = vand.u32 %v348, 4294901760
        %1424 = vmatmul.mubr.f32.gmra.mrb[0].mxu0 %v1423
        %v1425 = vpop.f32.mrb[0].mxu0
        %v1426 = vadd.f32 %v1343, %v1425
        %v1427 = vpop.f32.mrb[0].mxu0
        %v1428 = vadd.f32 %v1345, %v1427
        %1429 = vdwg.mxu0
        %vm1430 = vcmp.gt.f32.partialorder %v879, 20.0
        %vm1431 = vcmp.gt.f32.partialorder %v881, 20.0
        %vm1432 = vcmp.gt.f32.partialorder %v1419, 20.0
        %vm1433 = vcmp.gt.f32.partialorder %v1421, 20.0
        %vm1434 = vcmp.gt.f32.partialorder %v886, 20.0
        %vm1435 = vcmp.gt.f32.partialorder %v888, 20.0
        %vm1436 = vcmp.gt.f32.partialorder %v1426, 20.0
        %vm1437 = vcmp.gt.f32.partialorder %v1428, 20.0
        %v1438 = vmul.f32 %v879, 1.442695
        %v1439 = vpow.pop %v1438
        %v1440 = vmul.f32 %v881, 1.442695
        %v1441 = vpow.pop %v1440
        %v1442 = vmul.f32 %v1419, 1.442695
        %v1443 = vpow.pop %v1442
        %v1444 = vmul.f32 %v1421, 1.442695
        %v1445 = vpow.pop %v1444
        %v1446 = vmul.f32 %v886, 1.442695
        %v1447 = vpow.pop %v1446
        %v1448 = vmul.f32 %v888, 1.442695
        %v1449 = vpow.pop %v1448
        %v1450 = vmul.f32 %v1426, 1.442695
        %v1451 = vpow.pop %v1450
        %v1452 = vmul.f32 %v1428, 1.442695
        %v1453 = vpow.pop %v1452
        %v1454 = vadd.f32 %v1439, 1.0
        %v1455 = vlog2.pop %v1454
        %v1456 = vmul.f32 %v1455, 0.6931472
        %v1457 = vmul.f32 -0.5, %v1439
        %v1458 = vadd.f32 %v1457, 1.0
        %v1459 = vmul.f32 %v1458, %v1439
        %v1460 = vand.u32 2147483647, %v1439
        %vm1461 = vcmp.lt.f32.partialorder %v1460, 0.0004427343
        %v1462 = vsel %vm1461, %v1459, %v1456
        %v1463 = vadd.f32 %v1441, 1.0
        %v1464 = vlog2.pop %v1463
        %v1465 = vmul.f32 %v1464, 0.6931472
        %v1466 = vmul.f32 -0.5, %v1441
        %v1467 = vadd.f32 %v1466, 1.0
        %v1468 = vmul.f32 %v1467, %v1441
        %v1469 = vand.u32 2147483647, %v1441
        %vm1470 = vcmp.lt.f32.partialorder %v1469, 0.0004427343
        %v1471 = vsel %vm1470, %v1468, %v1465
        %v1472 = vadd.f32 %v1443, 1.0
        %v1473 = vlog2.pop %v1472
        %v1474 = vmul.f32 %v1473, 0.6931472
        %v1475 = vmul.f32 -0.5, %v1443
        %v1476 = vadd.f32 %v1475, 1.0
        %v1477 = vmul.f32 %v1476, %v1443
        %v1478 = vand.u32 2147483647, %v1443
        %vm1479 = vcmp.lt.f32.partialorder %v1478, 0.0004427343
        %v1480 = vsel %vm1479, %v1477, %v1474
        %v1481 = vadd.f32 %v1445, 1.0
        %v1482 = vlog2.pop %v1481
        %v1483 = vmul.f32 %v1482, 0.6931472
        %v1484 = vmul.f32 -0.5, %v1445
        %v1485 = vadd.f32 %v1484, 1.0
        %v1486 = vmul.f32 %v1485, %v1445
        %v1487 = vand.u32 2147483647, %v1445
        %vm1488 = vcmp.lt.f32.partialorder %v1487, 0.0004427343
        %v1489 = vsel %vm1488, %v1486, %v1483
        %v1490 = vadd.f32 %v1447, 1.0
        %v1491 = vlog2.pop %v1490
        %v1492 = vmul.f32 %v1491, 0.6931472
        %v1493 = vmul.f32 -0.5, %v1447
        %v1494 = vadd.f32 %v1493, 1.0
        %v1495 = vmul.f32 %v1494, %v1447
        %v1496 = vand.u32 2147483647, %v1447
        %vm1497 = vcmp.lt.f32.partialorder %v1496, 0.0004427343
        %v1498 = vsel %vm1497, %v1495, %v1492
        %v1499 = vadd.f32 %v1449, 1.0
        %v1500 = vlog2.pop %v1499
        %v1501 = vmul.f32 %v1500, 0.6931472
        %v1502 = vmul.f32 -0.5, %v1449
        %v1503 = vadd.f32 %v1502, 1.0
        %v1504 = vmul.f32 %v1503, %v1449
        %v1505 = vand.u32 2147483647, %v1449
        %vm1506 = vcmp.lt.f32.partialorder %v1505, 0.0004427343
        %v1507 = vsel %vm1506, %v1504, %v1501
        %v1508 = vadd.f32 %v1451, 1.0
        %v1509 = vlog2.pop %v1508
        %v1510 = vmul.f32 %v1509, 0.6931472
        %v1511 = vmul.f32 -0.5, %v1451
        %v1512 = vadd.f32 %v1511, 1.0
        %v1513 = vmul.f32 %v1512, %v1451
        %v1514 = vand.u32 2147483647, %v1451
        %vm1515 = vcmp.lt.f32.partialorder %v1514, 0.0004427343
        %v1516 = vsel %vm1515, %v1513, %v1510
        %v1517 = vadd.f32 %v1453, 1.0
        %v1518 = vlog2.pop %v1517
        %v1519 = vmul.f32 %v1518, 0.6931472
        %v1520 = vmul.f32 -0.5, %v1453
        %v1521 = vadd.f32 %v1520, 1.0
        %v1522 = vmul.f32 %v1521, %v1453
        %v1523 = vand.u32 2147483647, %v1453
        %vm1524 = vcmp.lt.f32.partialorder %v1523, 0.0004427343
        %v1525 = vsel %vm1524, %v1522, %v1519
        %v1526 = vsel %vm1430, %v879, %v1462
        %v1527 = vsel %vm1431, %v881, %v1471
        %v1528 = vsel %vm1432, %v1419, %v1480
        %v1529 = vsel %vm1433, %v1421, %v1489
        %v1530 = vsel %vm1434, %v886, %v1498
        %v1531 = vsel %vm1435, %v888, %v1507
        %v1532 = vsel %vm1436, %v1426, %v1516
        %v1533 = vsel %vm1437, %v1428, %v1525
        %1534 = vset.pattern.permute.xlu0 4
        %1535 = vperm.xlu0 %1534, %v169
        %v1536 = vpop.permute.xlu0 %1535
        %1538 = vset.pattern.permute.xlu0 4
        %1539 = vperm.xlu0 %1538, %v170
        %v1540 = vpop.permute.xlu0 %1539
        %v1543 = vsel %vm343, %v333, 0
        %v1546 = vsel %vm343, %v334, 0
        %v1548 = vand.u32 %v1527, 4294901760
        %1549 = vmatprep.subr.mxu0 %v1548
        %v1550 = vand.u32 %v1526, 4294901760
        %1551 = vmatpush1.msra.mxu0 %v1550
        %v1552 = vand.u32 %v1531, 4294901760
        %1553 = vmatprep.subr.mxu0 %v1552
        %v1554 = vand.u32 %v1530, 4294901760
        %1555 = vmatpush1.msra.mxu0 %v1554
        %1556 = vmatprep.subr.mxu0 0.0
        %1557 = vmatpush1.msra.mxu0 0.0
        %1558 = vmatprep.subr.mxu0 0.0
        %1559 = vmatpush1.msra.mxu0 0.0
        %1560 = vmatprep.subr.mxu0 0.0
        %1561 = vmatpush1.msra.mxu0 0.0
        %1562 = vmatprep.subr.mxu0 0.0
        %1563 = vmatpush1.msra.mxu0 0.0
        %1564 = vmatprep.subr.mxu0 0.0
        %1565 = vmatpush1.msra.mxu0 0.0
        %1566 = vmatprep.subr.mxu0 0.0
        %1567 = vmatpush1.msra.mxu0 0.0
        %1568 = vmatprep.subr.mxu0 0.0
        %1569 = vmatpush1.msra.mxu0 0.0
        %1570 = vmatprep.subr.mxu0 0.0
        %1571 = vmatpush1.msra.mxu0 0.0
        %1572 = vmatprep.subr.mxu0 0.0
        %1573 = vmatpush1.msra.mxu0 0.0
        %1574 = vmatprep.subr.mxu0 0.0
        %1575 = vmatpush1.msra.mxu0 0.0
        %1576 = vmatprep.subr.mxu0 0.0
        %1577 = vmatpush1.msra.mxu0 0.0
        %1578 = vmatprep.subr.mxu0 0.0
        %1579 = vmatpush1.msra.mxu0 0.0
        %1580 = vmatprep.subr.mxu0 0.0
        %1581 = vmatpush1.msra.mxu0 0.0
        %1582 = vmatprep.subr.mxu0 0.0
        %1583 = vmatpush1.msra.mxu0 0.0
        %1584 = vmatprep.subr.mxu0 0.0
        %1585 = vmatpush1.msra.mxu0 0.0
        %1586 = vmatprep.subr.mxu0 0.0
        %1587 = vmatpush1.msra.mxu0 0.0
        %1588 = vmatprep.subr.mxu0 0.0
        %1589 = vmatpush1.msra.mxu0 0.0
        %1590 = vmatprep.subr.mxu0 0.0
        %1591 = vmatpush1.msra.mxu0 0.0
        %1592 = vmatprep.subr.mxu0 0.0
        %1593 = vmatpush1.msra.mxu0 0.0
        %1594 = vmatprep.subr.mxu0 0.0
        %1595 = vmatpush1.msra.mxu0 0.0
        %1596 = vmatprep.subr.mxu0 0.0
        %1597 = vmatpush1.msra.mxu0 0.0
        %1598 = vmatprep.subr.mxu0 0.0
        %1599 = vmatpush1.msra.mxu0 0.0
        %1600 = vmatprep.subr.mxu0 0.0
        %1601 = vmatpush1.msra.mxu0 0.0
        %1602 = vmatprep.subr.mxu0 0.0
        %1603 = vmatpush1.msra.mxu0 0.0
        %1604 = vmatprep.subr.mxu0 0.0
        %1605 = vmatpush1.msra.mxu0 0.0
        %1606 = vmatprep.subr.mxu0 0.0
        %1607 = vmatpush1.msra.mxu0 0.0
        %1608 = vmatprep.subr.mxu0 0.0
        %1609 = vmatpush1.msra.mxu0 0.0
        %1610 = vmatprep.subr.mxu0 0.0
        %1611 = vmatpush1.msra.mxu0 0.0
        %1612 = vmatprep.subr.mxu0 0.0
        %1613 = vmatpush1.msra.mxu0 0.0
        %1614 = vmatprep.subr.mxu0 0.0
        %1615 = vmatpush1.msra.mxu0 0.0
        %1616 = vmatprep.mubr.f32.mxu0 0.0
        %v1617 = vand.u32 %v1543, 4294901760
        %v1618 = vsub.f32 %v1543, %v1617
        %v1619 = vand.u32 %v1618, 4294901760
        %v1620 = vsub.f32 %v1618, %v1619
        %v1621 = vand.u32 %v1620, 4294901760
        %1622 = vmatmul.mubr.f32.gmra.mrb[0].mxu0 %v1621
        %v1623 = vpop.f32.mrb[0].mxu0
        %v1624 = vadd.f32 %v1536, %v1623
        %v1625 = vpop.f32.mrb[0].mxu0
        %v1626 = vadd.f32 %v1536, %v1625
        %1627 = vmatprep.mubr.f32.mxu0 0.0
        %v1628 = vand.u32 %v1546, 4294901760
        %v1629 = vsub.f32 %v1546, %v1628
        %v1630 = vand.u32 %v1629, 4294901760
        %v1631 = vsub.f32 %v1629, %v1630
        %v1632 = vand.u32 %v1631, 4294901760
        %1633 = vmatmul.mubr.f32.gmra.mrb[0].mxu0 %v1632
        %v1634 = vpop.f32.mrb[0].mxu0
        %v1635 = vadd.f32 %v1540, %v1634
        %v1636 = vpop.f32.mrb[0].mxu0
        %v1637 = vadd.f32 %v1540, %v1636
        %1638 = vdwg.mxu0
        %v1639 = vand.u32 %v1527, 4294901760
        %v1640 = vsub.f32 %v1527, %v1639
        %v1641 = vand.u32 %v1640, 4294901760
        %v1642 = vsub.f32 %v1640, %v1641
        %v1643 = vand.u32 %v1642, 4294901760
        %1644 = vmatprep.subr.mxu0 %v1643
        %v1645 = vand.u32 %v1526, 4294901760
        %v1646 = vsub.f32 %v1526, %v1645
        %v1647 = vand.u32 %v1646, 4294901760
        %v1648 = vsub.f32 %v1646, %v1647
        %v1649 = vand.u32 %v1648, 4294901760
        %1650 = vmatpush1.msra.mxu0 %v1649
        %v1651 = vand.u32 %v1531, 4294901760
        %v1652 = vsub.f32 %v1531, %v1651
        %v1653 = vand.u32 %v1652, 4294901760
        %v1654 = vsub.f32 %v1652, %v1653
        %v1655 = vand.u32 %v1654, 4294901760
        %1656 = vmatprep.subr.mxu0 %v1655
        %v1657 = vand.u32 %v1530, 4294901760
        %v1658 = vsub.f32 %v1530, %v1657
        %v1659 = vand.u32 %v1658, 4294901760
        %v1660 = vsub.f32 %v1658, %v1659
        %v1661 = vand.u32 %v1660, 4294901760
        %1662 = vmatpush1.msra.mxu0 %v1661
        %1663 = vmatprep.subr.mxu0 0.0
        %1664 = vmatpush1.msra.mxu0 0.0
        %1665 = vmatprep.subr.mxu0 0.0
        %1666 = vmatpush1.msra.mxu0 0.0
        %1667 = vmatprep.subr.mxu0 0.0
        %1668 = vmatpush1.msra.mxu0 0.0
        %1669 = vmatprep.subr.mxu0 0.0
        %1670 = vmatpush1.msra.mxu0 0.0
        %1671 = vmatprep.subr.mxu0 0.0
        %1672 = vmatpush1.msra.mxu0 0.0
        %1673 = vmatprep.subr.mxu0 0.0
        %1674 = vmatpush1.msra.mxu0 0.0
        %1675 = vmatprep.subr.mxu0 0.0
        %1676 = vmatpush1.msra.mxu0 0.0
        %1677 = vmatprep.subr.mxu0 0.0
        %1678 = vmatpush1.msra.mxu0 0.0
        %1679 = vmatprep.subr.mxu0 0.0
        %1680 = vmatpush1.msra.mxu0 0.0
        %1681 = vmatprep.subr.mxu0 0.0
        %1682 = vmatpush1.msra.mxu0 0.0
        %1683 = vmatprep.subr.mxu0 0.0
        %1684 = vmatpush1.msra.mxu0 0.0
        %1685 = vmatprep.subr.mxu0 0.0
        %1686 = vmatpush1.msra.mxu0 0.0
        %1687 = vmatprep.subr.mxu0 0.0
        %1688 = vmatpush1.msra.mxu0 0.0
        %1689 = vmatprep.subr.mxu0 0.0
        %1690 = vmatpush1.msra.mxu0 0.0
        %1691 = vmatprep.subr.mxu0 0.0
        %1692 = vmatpush1.msra.mxu0 0.0
        %1693 = vmatprep.subr.mxu0 0.0
        %1694 = vmatpush1.msra.mxu0 0.0
        %1695 = vmatprep.subr.mxu0 0.0
        %1696 = vmatpush1.msra.mxu0 0.0
        %1697 = vmatprep.subr.mxu0 0.0
        %1698 = vmatpush1.msra.mxu0 0.0
        %1699 = vmatprep.subr.mxu0 0.0
        %1700 = vmatpush1.msra.mxu0 0.0
        %1701 = vmatprep.subr.mxu0 0.0
        %1702 = vmatpush1.msra.mxu0 0.0
        %1703 = vmatprep.subr.mxu0 0.0
        %1704 = vmatpush1.msra.mxu0 0.0
        %1705 = vmatprep.subr.mxu0 0.0
        %1706 = vmatpush1.msra.mxu0 0.0
        %1707 = vmatprep.subr.mxu0 0.0
        %1708 = vmatpush1.msra.mxu0 0.0
        %1709 = vmatprep.subr.mxu0 0.0
        %1710 = vmatpush1.msra.mxu0 0.0
        %1711 = vmatprep.subr.mxu0 0.0
        %1712 = vmatpush1.msra.mxu0 0.0
        %1713 = vmatprep.subr.mxu0 0.0
        %1714 = vmatpush1.msra.mxu0 0.0
        %1715 = vmatprep.subr.mxu0 0.0
        %1716 = vmatpush1.msra.mxu0 0.0
        %1717 = vmatprep.subr.mxu0 0.0
        %1718 = vmatpush1.msra.mxu0 0.0
        %1719 = vmatprep.subr.mxu0 0.0
        %1720 = vmatpush1.msra.mxu0 0.0
        %1721 = vmatprep.subr.mxu0 0.0
        %1722 = vmatpush1.msra.mxu0 0.0
        %1723 = vmatprep.mubr.f32.mxu0 0.0
        %v1724 = vand.u32 %v1543, 4294901760
        %1725 = vmatmul.mubr.f32.gmra.mrb[0].mxu0 %v1724
        %v1726 = vpop.f32.mrb[0].mxu0
        %v1727 = vadd.f32 %v1624, %v1726
        %v1728 = vpop.f32.mrb[0].mxu0
        %v1729 = vadd.f32 %v1626, %v1728
        %1730 = vmatprep.mubr.f32.mxu0 0.0
        %v1731 = vand.u32 %v1546, 4294901760
        %1732 = vmatmul.mubr.f32.gmra.mrb[0].mxu0 %v1731
        %v1733 = vpop.f32.mrb[0].mxu0
        %v1734 = vadd.f32 %v1635, %v1733
        %v1735 = vpop.f32.mrb[0].mxu0
        %v1736 = vadd.f32 %v1637, %v1735
        %1737 = vdwg.mxu0
        %v1738 = vand.u32 %v1527, 4294901760
        %v1739 = vsub.f32 %v1527, %v1738
        %1740 = vmatprep.subr.mxu0 %v1739
        %v1741 = vand.u32 %v1526, 4294901760
        %v1742 = vsub.f32 %v1526, %v1741
        %1743 = vmatpush1.msra.mxu0 %v1742
        %v1744 = vand.u32 %v1531, 4294901760
        %v1745 = vsub.f32 %v1531, %v1744
        %1746 = vmatprep.subr.mxu0 %v1745
        %v1747 = vand.u32 %v1530, 4294901760
        %v1748 = vsub.f32 %v1530, %v1747
        %1749 = vmatpush1.msra.mxu0 %v1748
        %1750 = vmatprep.subr.mxu0 0.0
        %1751 = vmatpush1.msra.mxu0 0.0
        %1752 = vmatprep.subr.mxu0 0.0
        %1753 = vmatpush1.msra.mxu0 0.0
        %1754 = vmatprep.subr.mxu0 0.0
        %1755 = vmatpush1.msra.mxu0 0.0
        %1756 = vmatprep.subr.mxu0 0.0
        %1757 = vmatpush1.msra.mxu0 0.0
        %1758 = vmatprep.subr.mxu0 0.0
        %1759 = vmatpush1.msra.mxu0 0.0
        %1760 = vmatprep.subr.mxu0 0.0
        %1761 = vmatpush1.msra.mxu0 0.0
        %1762 = vmatprep.subr.mxu0 0.0
        %1763 = vmatpush1.msra.mxu0 0.0
        %1764 = vmatprep.subr.mxu0 0.0
        %1765 = vmatpush1.msra.mxu0 0.0
        %1766 = vmatprep.subr.mxu0 0.0
        %1767 = vmatpush1.msra.mxu0 0.0
        %1768 = vmatprep.subr.mxu0 0.0
        %1769 = vmatpush1.msra.mxu0 0.0
        %1770 = vmatprep.subr.mxu0 0.0
        %1771 = vmatpush1.msra.mxu0 0.0
        %1772 = vmatprep.subr.mxu0 0.0
        %1773 = vmatpush1.msra.mxu0 0.0
        %1774 = vmatprep.subr.mxu0 0.0
        %1775 = vmatpush1.msra.mxu0 0.0
        %1776 = vmatprep.subr.mxu0 0.0
        %1777 = vmatpush1.msra.mxu0 0.0
        %1778 = vmatprep.subr.mxu0 0.0
        %1779 = vmatpush1.msra.mxu0 0.0
        %1780 = vmatprep.subr.mxu0 0.0
        %1781 = vmatpush1.msra.mxu0 0.0
        %1782 = vmatprep.subr.mxu0 0.0
        %1783 = vmatpush1.msra.mxu0 0.0
        %1784 = vmatprep.subr.mxu0 0.0
        %1785 = vmatpush1.msra.mxu0 0.0
        %1786 = vmatprep.subr.mxu0 0.0
        %1787 = vmatpush1.msra.mxu0 0.0
        %1788 = vmatprep.subr.mxu0 0.0
        %1789 = vmatpush1.msra.mxu0 0.0
        %1790 = vmatprep.subr.mxu0 0.0
        %1791 = vmatpush1.msra.mxu0 0.0
        %1792 = vmatprep.subr.mxu0 0.0
        %1793 = vmatpush1.msra.mxu0 0.0
        %1794 = vmatprep.subr.mxu0 0.0
        %1795 = vmatpush1.msra.mxu0 0.0
        %1796 = vmatprep.subr.mxu0 0.0
        %1797 = vmatpush1.msra.mxu0 0.0
        %1798 = vmatprep.subr.mxu0 0.0
        %1799 = vmatpush1.msra.mxu0 0.0
        %1800 = vmatprep.subr.mxu0 0.0
        %1801 = vmatpush1.msra.mxu0 0.0
        %1802 = vmatprep.subr.mxu0 0.0
        %1803 = vmatpush1.msra.mxu0 0.0
        %1804 = vmatprep.subr.mxu0 0.0
        %1805 = vmatpush1.msra.mxu0 0.0
        %1806 = vmatprep.subr.mxu0 0.0
        %1807 = vmatpush1.msra.mxu0 0.0
        %1808 = vmatprep.subr.mxu0 0.0
        %1809 = vmatpush1.msra.mxu0 0.0
        %1810 = vmatprep.mubr.f32.mxu0 0.0
        %v1811 = vand.u32 %v1543, 4294901760
        %v1812 = vsub.f32 %v1543, %v1811
        %1813 = vmatmul.mubr.f32.gmra.mrb[0].mxu0 %v1812
        %v1814 = vpop.f32.mrb[0].mxu0
        %v1815 = vadd.f32 %v1727, %v1814
        %v1816 = vpop.f32.mrb[0].mxu0
        %v1817 = vadd.f32 %v1729, %v1816
        %1818 = vmatprep.mubr.f32.mxu0 0.0
        %v1819 = vand.u32 %v1546, 4294901760
        %v1820 = vsub.f32 %v1546, %v1819
        %1821 = vmatmul.mubr.f32.gmra.mrb[0].mxu0 %v1820
        %v1822 = vpop.f32.mrb[0].mxu0
        %v1823 = vadd.f32 %v1734, %v1822
        %v1824 = vpop.f32.mrb[0].mxu0
        %v1825 = vadd.f32 %v1736, %v1824
        %1826 = vdwg.mxu0
        %v1827 = vand.u32 %v1527, 4294901760
        %1828 = vmatprep.subr.mxu0 %v1827
        %v1829 = vand.u32 %v1526, 4294901760
        %1830 = vmatpush1.msra.mxu0 %v1829
        %v1831 = vand.u32 %v1531, 4294901760
        %1832 = vmatprep.subr.mxu0 %v1831
        %v1833 = vand.u32 %v1530, 4294901760
        %1834 = vmatpush1.msra.mxu0 %v1833
        %1835 = vmatprep.subr.mxu0 0.0
        %1836 = vmatpush1.msra.mxu0 0.0
        %1837 = vmatprep.subr.mxu0 0.0
        %1838 = vmatpush1.msra.mxu0 0.0
        %1839 = vmatprep.subr.mxu0 0.0
        %1840 = vmatpush1.msra.mxu0 0.0
        %1841 = vmatprep.subr.mxu0 0.0
        %1842 = vmatpush1.msra.mxu0 0.0
        %1843 = vmatprep.subr.mxu0 0.0
        %1844 = vmatpush1.msra.mxu0 0.0
        %1845 = vmatprep.subr.mxu0 0.0
        %1846 = vmatpush1.msra.mxu0 0.0
        %1847 = vmatprep.subr.mxu0 0.0
        %1848 = vmatpush1.msra.mxu0 0.0
        %1849 = vmatprep.subr.mxu0 0.0
        %1850 = vmatpush1.msra.mxu0 0.0
        %1851 = vmatprep.subr.mxu0 0.0
        %1852 = vmatpush1.msra.mxu0 0.0
        %1853 = vmatprep.subr.mxu0 0.0
        %1854 = vmatpush1.msra.mxu0 0.0
        %1855 = vmatprep.subr.mxu0 0.0
        %1856 = vmatpush1.msra.mxu0 0.0
        %1857 = vmatprep.subr.mxu0 0.0
        %1858 = vmatpush1.msra.mxu0 0.0
        %1859 = vmatprep.subr.mxu0 0.0
        %1860 = vmatpush1.msra.mxu0 0.0
        %1861 = vmatprep.subr.mxu0 0.0
        %1862 = vmatpush1.msra.mxu0 0.0
        %1863 = vmatprep.subr.mxu0 0.0
        %1864 = vmatpush1.msra.mxu0 0.0
        %1865 = vmatprep.subr.mxu0 0.0
        %1866 = vmatpush1.msra.mxu0 0.0
        %1867 = vmatprep.subr.mxu0 0.0
        %1868 = vmatpush1.msra.mxu0 0.0
        %1869 = vmatprep.subr.mxu0 0.0
        %1870 = vmatpush1.msra.mxu0 0.0
        %1871 = vmatprep.subr.mxu0 0.0
        %1872 = vmatpush1.msra.mxu0 0.0
        %1873 = vmatprep.subr.mxu0 0.0
        %1874 = vmatpush1.msra.mxu0 0.0
        %1875 = vmatprep.subr.mxu0 0.0
        %1876 = vmatpush1.msra.mxu0 0.0
        %1877 = vmatprep.subr.mxu0 0.0
        %1878 = vmatpush1.msra.mxu0 0.0
        %1879 = vmatprep.subr.mxu0 0.0
        %1880 = vmatpush1.msra.mxu0 0.0
        %1881 = vmatprep.subr.mxu0 0.0
        %1882 = vmatpush1.msra.mxu0 0.0
        %1883 = vmatprep.subr.mxu0 0.0
        %1884 = vmatpush1.msra.mxu0 0.0
        %1885 = vmatprep.subr.mxu0 0.0
        %1886 = vmatpush1.msra.mxu0 0.0
        %1887 = vmatprep.subr.mxu0 0.0
        %1888 = vmatpush1.msra.mxu0 0.0
        %1889 = vmatprep.subr.mxu0 0.0
        %1890 = vmatpush1.msra.mxu0 0.0
        %1891 = vmatprep.subr.mxu0 0.0
        %1892 = vmatpush1.msra.mxu0 0.0
        %1893 = vmatprep.subr.mxu0 0.0
        %1894 = vmatpush1.msra.mxu0 0.0
        %1895 = vmatprep.mubr.f32.mxu0 0.0
        %v1896 = vand.u32 %v1543, 4294901760
        %v1897 = vsub.f32 %v1543, %v1896
        %v1898 = vand.u32 %v1897, 4294901760
        %1899 = vmatmul.mubr.f32.gmra.mrb[0].mxu0 %v1898
        %v1900 = vpop.f32.mrb[0].mxu0
        %v1901 = vadd.f32 %v1815, %v1900
        %v1902 = vpop.f32.mrb[0].mxu0
        %v1903 = vadd.f32 %v1817, %v1902
        %1904 = vmatprep.mubr.f32.mxu0 0.0
        %v1905 = vand.u32 %v1546, 4294901760
        %v1906 = vsub.f32 %v1546, %v1905
        %v1907 = vand.u32 %v1906, 4294901760
        %1908 = vmatmul.mubr.f32.gmra.mrb[0].mxu0 %v1907
        %v1909 = vpop.f32.mrb[0].mxu0
        %v1910 = vadd.f32 %v1823, %v1909
        %v1911 = vpop.f32.mrb[0].mxu0
        %v1912 = vadd.f32 %v1825, %v1911
        %1913 = vdwg.mxu0
        %v1914 = vand.u32 %v1527, 4294901760
        %v1915 = vsub.f32 %v1527, %v1914
        %v1916 = vand.u32 %v1915, 4294901760
        %1917 = vmatprep.subr.mxu0 %v1916
        %v1918 = vand.u32 %v1526, 4294901760
        %v1919 = vsub.f32 %v1526, %v1918
        %v1920 = vand.u32 %v1919, 4294901760
        %1921 = vmatpush1.msra.mxu0 %v1920
        %v1922 = vand.u32 %v1531, 4294901760
        %v1923 = vsub.f32 %v1531, %v1922
        %v1924 = vand.u32 %v1923, 4294901760
        %1925 = vmatprep.subr.mxu0 %v1924
        %v1926 = vand.u32 %v1530, 4294901760
        %v1927 = vsub.f32 %v1530, %v1926
        %v1928 = vand.u32 %v1927, 4294901760
        %1929 = vmatpush1.msra.mxu0 %v1928
        %1930 = vmatprep.subr.mxu0 0.0
        %1931 = vmatpush1.msra.mxu0 0.0
        %1932 = vmatprep.subr.mxu0 0.0
        %1933 = vmatpush1.msra.mxu0 0.0
        %1934 = vmatprep.subr.mxu0 0.0
        %1935 = vmatpush1.msra.mxu0 0.0
        %1936 = vmatprep.subr.mxu0 0.0
        %1937 = vmatpush1.msra.mxu0 0.0
        %1938 = vmatprep.subr.mxu0 0.0
        %1939 = vmatpush1.msra.mxu0 0.0
        %1940 = vmatprep.subr.mxu0 0.0
        %1941 = vmatpush1.msra.mxu0 0.0
        %1942 = vmatprep.subr.mxu0 0.0
        %1943 = vmatpush1.msra.mxu0 0.0
        %1944 = vmatprep.subr.mxu0 0.0
        %1945 = vmatpush1.msra.mxu0 0.0
        %1946 = vmatprep.subr.mxu0 0.0
        %1947 = vmatpush1.msra.mxu0 0.0
        %1948 = vmatprep.subr.mxu0 0.0
        %1949 = vmatpush1.msra.mxu0 0.0
        %1950 = vmatprep.subr.mxu0 0.0
        %1951 = vmatpush1.msra.mxu0 0.0
        %1952 = vmatprep.subr.mxu0 0.0
        %1953 = vmatpush1.msra.mxu0 0.0
        %1954 = vmatprep.subr.mxu0 0.0
        %1955 = vmatpush1.msra.mxu0 0.0
        %1956 = vmatprep.subr.mxu0 0.0
        %1957 = vmatpush1.msra.mxu0 0.0
        %1958 = vmatprep.subr.mxu0 0.0
        %1959 = vmatpush1.msra.mxu0 0.0
        %1960 = vmatprep.subr.mxu0 0.0
        %1961 = vmatpush1.msra.mxu0 0.0
        %1962 = vmatprep.subr.mxu0 0.0
        %1963 = vmatpush1.msra.mxu0 0.0
        %1964 = vmatprep.subr.mxu0 0.0
        %1965 = vmatpush1.msra.mxu0 0.0
        %1966 = vmatprep.subr.mxu0 0.0
        %1967 = vmatpush1.msra.mxu0 0.0
        %1968 = vmatprep.subr.mxu0 0.0
        %1969 = vmatpush1.msra.mxu0 0.0
        %1970 = vmatprep.subr.mxu0 0.0
        %1971 = vmatpush1.msra.mxu0 0.0
        %1972 = vmatprep.subr.mxu0 0.0
        %1973 = vmatpush1.msra.mxu0 0.0
        %1974 = vmatprep.subr.mxu0 0.0
        %1975 = vmatpush1.msra.mxu0 0.0
        %1976 = vmatprep.subr.mxu0 0.0
        %1977 = vmatpush1.msra.mxu0 0.0
        %1978 = vmatprep.subr.mxu0 0.0
        %1979 = vmatpush1.msra.mxu0 0.0
        %1980 = vmatprep.subr.mxu0 0.0
        %1981 = vmatpush1.msra.mxu0 0.0
        %1982 = vmatprep.subr.mxu0 0.0
        %1983 = vmatpush1.msra.mxu0 0.0
        %1984 = vmatprep.subr.mxu0 0.0
        %1985 = vmatpush1.msra.mxu0 0.0
        %1986 = vmatprep.subr.mxu0 0.0
        %1987 = vmatpush1.msra.mxu0 0.0
        %1988 = vmatprep.subr.mxu0 0.0
        %1989 = vmatpush1.msra.mxu0 0.0
        %1990 = vmatprep.mubr.f32.mxu0 0.0
        %v1991 = vand.u32 %v1543, 4294901760
        %1992 = vmatmul.mubr.f32.gmra.mrb[0].mxu0 %v1991
        %v1993 = vpop.f32.mrb[0].mxu0
        %v1994 = vadd.f32 %v1901, %v1993
        %v1995 = vpop.f32.mrb[0].mxu0
        %v1996 = vadd.f32 %v1903, %v1995
        %1997 = vmatprep.mubr.f32.mxu0 0.0
        %v1998 = vand.u32 %v1546, 4294901760
        %1999 = vmatmul.mubr.f32.gmra.mrb[0].mxu0 %v1998
        %v2000 = vpop.f32.mrb[0].mxu0
        %v2001 = vadd.f32 %v1910, %v2000
        %v2002 = vpop.f32.mrb[0].mxu0
        %v2003 = vadd.f32 %v1912, %v2002
        %2004 = vdwg.mxu0
        %v2005 = vand.u32 %v1527, 4294901760
        %2006 = vmatprep.subr.mxu0 %v2005
        %v2007 = vand.u32 %v1526, 4294901760
        %2008 = vmatpush1.msra.mxu0 %v2007
        %v2009 = vand.u32 %v1531, 4294901760
        %2010 = vmatprep.subr.mxu0 %v2009
        %v2011 = vand.u32 %v1530, 4294901760
        %2012 = vmatpush1.msra.mxu0 %v2011
        %2013 = vmatprep.subr.mxu0 0.0
        %2014 = vmatpush1.msra.mxu0 0.0
        %2015 = vmatprep.subr.mxu0 0.0
        %2016 = vmatpush1.msra.mxu0 0.0
        %2017 = vmatprep.subr.mxu0 0.0
        %2018 = vmatpush1.msra.mxu0 0.0
        %2019 = vmatprep.subr.mxu0 0.0
        %2020 = vmatpush1.msra.mxu0 0.0
        %2021 = vmatprep.subr.mxu0 0.0
        %2022 = vmatpush1.msra.mxu0 0.0
        %2023 = vmatprep.subr.mxu0 0.0
        %2024 = vmatpush1.msra.mxu0 0.0
        %2025 = vmatprep.subr.mxu0 0.0
        %2026 = vmatpush1.msra.mxu0 0.0
        %2027 = vmatprep.subr.mxu0 0.0
        %2028 = vmatpush1.msra.mxu0 0.0
        %2029 = vmatprep.subr.mxu0 0.0
        %2030 = vmatpush1.msra.mxu0 0.0
        %2031 = vmatprep.subr.mxu0 0.0
        %2032 = vmatpush1.msra.mxu0 0.0
        %2033 = vmatprep.subr.mxu0 0.0
        %2034 = vmatpush1.msra.mxu0 0.0
        %2035 = vmatprep.subr.mxu0 0.0
        %2036 = vmatpush1.msra.mxu0 0.0
        %2037 = vmatprep.subr.mxu0 0.0
        %2038 = vmatpush1.msra.mxu0 0.0
        %2039 = vmatprep.subr.mxu0 0.0
        %2040 = vmatpush1.msra.mxu0 0.0
        %2041 = vmatprep.subr.mxu0 0.0
        %2042 = vmatpush1.msra.mxu0 0.0
        %2043 = vmatprep.subr.mxu0 0.0
        %2044 = vmatpush1.msra.mxu0 0.0
        %2045 = vmatprep.subr.mxu0 0.0
        %2046 = vmatpush1.msra.mxu0 0.0
        %2047 = vmatprep.subr.mxu0 0.0
        %2048 = vmatpush1.msra.mxu0 0.0
        %2049 = vmatprep.subr.mxu0 0.0
        %2050 = vmatpush1.msra.mxu0 0.0
        %2051 = vmatprep.subr.mxu0 0.0
        %2052 = vmatpush1.msra.mxu0 0.0
        %2053 = vmatprep.subr.mxu0 0.0
        %2054 = vmatpush1.msra.mxu0 0.0
        %2055 = vmatprep.subr.mxu0 0.0
        %2056 = vmatpush1.msra.mxu0 0.0
        %2057 = vmatprep.subr.mxu0 0.0
        %2058 = vmatpush1.msra.mxu0 0.0
        %2059 = vmatprep.subr.mxu0 0.0
        %2060 = vmatpush1.msra.mxu0 0.0
        %2061 = vmatprep.subr.mxu0 0.0
        %2062 = vmatpush1.msra.mxu0 0.0
        %2063 = vmatprep.subr.mxu0 0.0
        %2064 = vmatpush1.msra.mxu0 0.0
        %2065 = vmatprep.subr.mxu0 0.0
        %2066 = vmatpush1.msra.mxu0 0.0
        %2067 = vmatprep.subr.mxu0 0.0
        %2068 = vmatpush1.msra.mxu0 0.0
        %2069 = vmatprep.subr.mxu0 0.0
        %2070 = vmatpush1.msra.mxu0 0.0
        %2071 = vmatprep.subr.mxu0 0.0
        %2072 = vmatpush1.msra.mxu0 0.0
        %2073 = vmatprep.mubr.f32.mxu0 0.0
        %v2074 = vand.u32 %v1543, 4294901760
        %2075 = vmatmul.mubr.f32.gmra.mrb[0].mxu0 %v2074
        %v2076 = vpop.f32.mrb[0].mxu0
        %v2077 = vadd.f32 %v1994, %v2076
        %v2078 = vpop.f32.mrb[0].mxu0
        %v2079 = vadd.f32 %v1996, %v2078
        %2080 = vmatprep.mubr.f32.mxu0 0.0
        %v2081 = vand.u32 %v1546, 4294901760
        %2082 = vmatmul.mubr.f32.gmra.mrb[0].mxu0 %v2081
        %v2083 = vpop.f32.mrb[0].mxu0
        %v2084 = vadd.f32 %v2001, %v2083
        %v2085 = vpop.f32.mrb[0].mxu0
        %v2086 = vadd.f32 %v2003, %v2085
        %2087 = vdwg.mxu0
        %v2088 = vand.u32 %v1529, 4294901760
        %2089 = vmatprep.subr.mxu0 %v2088
        %v2090 = vand.u32 %v1528, 4294901760
        %2091 = vmatpush1.msra.mxu0 %v2090
        %v2092 = vand.u32 %v1533, 4294901760
        %2093 = vmatprep.subr.mxu0 %v2092
        %v2094 = vand.u32 %v1532, 4294901760
        %2095 = vmatpush1.msra.mxu0 %v2094
        %2096 = vmatprep.subr.mxu0 0.0
        %2097 = vmatpush1.msra.mxu0 0.0
        %2098 = vmatprep.subr.mxu0 0.0
        %2099 = vmatpush1.msra.mxu0 0.0
        %2100 = vmatprep.subr.mxu0 0.0
        %2101 = vmatpush1.msra.mxu0 0.0
        %2102 = vmatprep.subr.mxu0 0.0
        %2103 = vmatpush1.msra.mxu0 0.0
        %2104 = vmatprep.subr.mxu0 0.0
        %2105 = vmatpush1.msra.mxu0 0.0
        %2106 = vmatprep.subr.mxu0 0.0
        %2107 = vmatpush1.msra.mxu0 0.0
        %2108 = vmatprep.subr.mxu0 0.0
        %2109 = vmatpush1.msra.mxu0 0.0
        %2110 = vmatprep.subr.mxu0 0.0
        %2111 = vmatpush1.msra.mxu0 0.0
        %2112 = vmatprep.subr.mxu0 0.0
        %2113 = vmatpush1.msra.mxu0 0.0
        %2114 = vmatprep.subr.mxu0 0.0
        %2115 = vmatpush1.msra.mxu0 0.0
        %2116 = vmatprep.subr.mxu0 0.0
        %2117 = vmatpush1.msra.mxu0 0.0
        %2118 = vmatprep.subr.mxu0 0.0
        %2119 = vmatpush1.msra.mxu0 0.0
        %2120 = vmatprep.subr.mxu0 0.0
        %2121 = vmatpush1.msra.mxu0 0.0
        %2122 = vmatprep.subr.mxu0 0.0
        %2123 = vmatpush1.msra.mxu0 0.0
        %2124 = vmatprep.subr.mxu0 0.0
        %2125 = vmatpush1.msra.mxu0 0.0
        %2126 = vmatprep.subr.mxu0 0.0
        %2127 = vmatpush1.msra.mxu0 0.0
        %2128 = vmatprep.subr.mxu0 0.0
        %2129 = vmatpush1.msra.mxu0 0.0
        %2130 = vmatprep.subr.mxu0 0.0
        %2131 = vmatpush1.msra.mxu0 0.0
        %2132 = vmatprep.subr.mxu0 0.0
        %2133 = vmatpush1.msra.mxu0 0.0
        %2134 = vmatprep.subr.mxu0 0.0
        %2135 = vmatpush1.msra.mxu0 0.0
        %2136 = vmatprep.subr.mxu0 0.0
        %2137 = vmatpush1.msra.mxu0 0.0
        %2138 = vmatprep.subr.mxu0 0.0
        %2139 = vmatpush1.msra.mxu0 0.0
        %2140 = vmatprep.subr.mxu0 0.0
        %2141 = vmatpush1.msra.mxu0 0.0
        %2142 = vmatprep.subr.mxu0 0.0
        %2143 = vmatpush1.msra.mxu0 0.0
        %2144 = vmatprep.subr.mxu0 0.0
        %2145 = vmatpush1.msra.mxu0 0.0
        %2146 = vmatprep.subr.mxu0 0.0
        %2147 = vmatpush1.msra.mxu0 0.0
        %2148 = vmatprep.subr.mxu0 0.0
        %2149 = vmatpush1.msra.mxu0 0.0
        %2150 = vmatprep.subr.mxu0 0.0
        %2151 = vmatpush1.msra.mxu0 0.0
        %2152 = vmatprep.subr.mxu0 0.0
        %2153 = vmatpush1.msra.mxu0 0.0
        %2154 = vmatprep.subr.mxu0 0.0
        %2155 = vmatpush1.msra.mxu0 0.0
        %2156 = vmatprep.mubr.f32.mxu0 0.0
        %v2157 = vand.u32 %v1543, 4294901760
        %v2158 = vsub.f32 %v1543, %v2157
        %v2159 = vand.u32 %v2158, 4294901760
        %v2160 = vsub.f32 %v2158, %v2159
        %v2161 = vand.u32 %v2160, 4294901760
        %2162 = vmatmul.mubr.f32.gmra.mrb[0].mxu0 %v2161
        %v2163 = vpop.f32.mrb[0].mxu0
        %v2164 = vadd.f32 %v1536, %v2163
        %v2165 = vpop.f32.mrb[0].mxu0
        %v2166 = vadd.f32 %v1536, %v2165
        %2167 = vmatprep.mubr.f32.mxu0 0.0
        %v2168 = vand.u32 %v1546, 4294901760
        %v2169 = vsub.f32 %v1546, %v2168
        %v2170 = vand.u32 %v2169, 4294901760
        %v2171 = vsub.f32 %v2169, %v2170
        %v2172 = vand.u32 %v2171, 4294901760
        %2173 = vmatmul.mubr.f32.gmra.mrb[0].mxu0 %v2172
        %v2174 = vpop.f32.mrb[0].mxu0
        %v2175 = vadd.f32 %v1540, %v2174
        %v2176 = vpop.f32.mrb[0].mxu0
        %v2177 = vadd.f32 %v1540, %v2176
        %2178 = vdwg.mxu0
        %v2179 = vand.u32 %v1529, 4294901760
        %v2180 = vsub.f32 %v1529, %v2179
        %v2181 = vand.u32 %v2180, 4294901760
        %v2182 = vsub.f32 %v2180, %v2181
        %v2183 = vand.u32 %v2182, 4294901760
        %2184 = vmatprep.subr.mxu0 %v2183
        %v2185 = vand.u32 %v1528, 4294901760
        %v2186 = vsub.f32 %v1528, %v2185
        %v2187 = vand.u32 %v2186, 4294901760
        %v2188 = vsub.f32 %v2186, %v2187
        %v2189 = vand.u32 %v2188, 4294901760
        %2190 = vmatpush1.msra.mxu0 %v2189
        %v2191 = vand.u32 %v1533, 4294901760
        %v2192 = vsub.f32 %v1533, %v2191
        %v2193 = vand.u32 %v2192, 4294901760
        %v2194 = vsub.f32 %v2192, %v2193
        %v2195 = vand.u32 %v2194, 4294901760
        %2196 = vmatprep.subr.mxu0 %v2195
        %v2197 = vand.u32 %v1532, 4294901760
        %v2198 = vsub.f32 %v1532, %v2197
        %v2199 = vand.u32 %v2198, 4294901760
        %v2200 = vsub.f32 %v2198, %v2199
        %v2201 = vand.u32 %v2200, 4294901760
        %2202 = vmatpush1.msra.mxu0 %v2201
        %2203 = vmatprep.subr.mxu0 0.0
        %2204 = vmatpush1.msra.mxu0 0.0
        %2205 = vmatprep.subr.mxu0 0.0
        %2206 = vmatpush1.msra.mxu0 0.0
        %2207 = vmatprep.subr.mxu0 0.0
        %2208 = vmatpush1.msra.mxu0 0.0
        %2209 = vmatprep.subr.mxu0 0.0
        %2210 = vmatpush1.msra.mxu0 0.0
        %2211 = vmatprep.subr.mxu0 0.0
        %2212 = vmatpush1.msra.mxu0 0.0
        %2213 = vmatprep.subr.mxu0 0.0
        %2214 = vmatpush1.msra.mxu0 0.0
        %2215 = vmatprep.subr.mxu0 0.0
        %2216 = vmatpush1.msra.mxu0 0.0
        %2217 = vmatprep.subr.mxu0 0.0
        %2218 = vmatpush1.msra.mxu0 0.0
        %2219 = vmatprep.subr.mxu0 0.0
        %2220 = vmatpush1.msra.mxu0 0.0
        %2221 = vmatprep.subr.mxu0 0.0
        %2222 = vmatpush1.msra.mxu0 0.0
        %2223 = vmatprep.subr.mxu0 0.0
        %2224 = vmatpush1.msra.mxu0 0.0
        %2225 = vmatprep.subr.mxu0 0.0
        %2226 = vmatpush1.msra.mxu0 0.0
        %2227 = vmatprep.subr.mxu0 0.0
        %2228 = vmatpush1.msra.mxu0 0.0
        %2229 = vmatprep.subr.mxu0 0.0
        %2230 = vmatpush1.msra.mxu0 0.0
        %2231 = vmatprep.subr.mxu0 0.0
        %2232 = vmatpush1.msra.mxu0 0.0
        %2233 = vmatprep.subr.mxu0 0.0
        %2234 = vmatpush1.msra.mxu0 0.0
        %2235 = vmatprep.subr.mxu0 0.0
        %2236 = vmatpush1.msra.mxu0 0.0
        %2237 = vmatprep.subr.mxu0 0.0
        %2238 = vmatpush1.msra.mxu0 0.0
        %2239 = vmatprep.subr.mxu0 0.0
        %2240 = vmatpush1.msra.mxu0 0.0
        %2241 = vmatprep.subr.mxu0 0.0
        %2242 = vmatpush1.msra.mxu0 0.0
        %2243 = vmatprep.subr.mxu0 0.0
        %2244 = vmatpush1.msra.mxu0 0.0
        %2245 = vmatprep.subr.mxu0 0.0
        %2246 = vmatpush1.msra.mxu0 0.0
        %2247 = vmatprep.subr.mxu0 0.0
        %2248 = vmatpush1.msra.mxu0 0.0
        %2249 = vmatprep.subr.mxu0 0.0
        %2250 = vmatpush1.msra.mxu0 0.0
        %2251 = vmatprep.subr.mxu0 0.0
        %2252 = vmatpush1.msra.mxu0 0.0
        %2253 = vmatprep.subr.mxu0 0.0
        %2254 = vmatpush1.msra.mxu0 0.0
        %2255 = vmatprep.subr.mxu0 0.0
        %2256 = vmatpush1.msra.mxu0 0.0
        %2257 = vmatprep.subr.mxu0 0.0
        %2258 = vmatpush1.msra.mxu0 0.0
        %2259 = vmatprep.subr.mxu0 0.0
        %2260 = vmatpush1.msra.mxu0 0.0
        %2261 = vmatprep.subr.mxu0 0.0
        %2262 = vmatpush1.msra.mxu0 0.0
        %2263 = vmatprep.mubr.f32.mxu0 0.0
        %v2264 = vand.u32 %v1543, 4294901760
        %2265 = vmatmul.mubr.f32.gmra.mrb[0].mxu0 %v2264
        %v2266 = vpop.f32.mrb[0].mxu0
        %v2267 = vadd.f32 %v2164, %v2266
        %v2268 = vpop.f32.mrb[0].mxu0
        %v2269 = vadd.f32 %v2166, %v2268
        %2270 = vmatprep.mubr.f32.mxu0 0.0
        %v2271 = vand.u32 %v1546, 4294901760
        %2272 = vmatmul.mubr.f32.gmra.mrb[0].mxu0 %v2271
        %v2273 = vpop.f32.mrb[0].mxu0
        %v2274 = vadd.f32 %v2175, %v2273
        %v2275 = vpop.f32.mrb[0].mxu0
        %v2276 = vadd.f32 %v2177, %v2275
        %2277 = vdwg.mxu0
        %v2278 = vand.u32 %v1529, 4294901760
        %v2279 = vsub.f32 %v1529, %v2278
        %2280 = vmatprep.subr.mxu0 %v2279
        %v2281 = vand.u32 %v1528, 4294901760
        %v2282 = vsub.f32 %v1528, %v2281
        %2283 = vmatpush1.msra.mxu0 %v2282
        %v2284 = vand.u32 %v1533, 4294901760
        %v2285 = vsub.f32 %v1533, %v2284
        %2286 = vmatprep.subr.mxu0 %v2285
        %v2287 = vand.u32 %v1532, 4294901760
        %v2288 = vsub.f32 %v1532, %v2287
        %2289 = vmatpush1.msra.mxu0 %v2288
        %2290 = vmatprep.subr.mxu0 0.0
        %2291 = vmatpush1.msra.mxu0 0.0
        %2292 = vmatprep.subr.mxu0 0.0
        %2293 = vmatpush1.msra.mxu0 0.0
        %2294 = vmatprep.subr.mxu0 0.0
        %2295 = vmatpush1.msra.mxu0 0.0
        %2296 = vmatprep.subr.mxu0 0.0
        %2297 = vmatpush1.msra.mxu0 0.0
        %2298 = vmatprep.subr.mxu0 0.0
        %2299 = vmatpush1.msra.mxu0 0.0
        %2300 = vmatprep.subr.mxu0 0.0
        %2301 = vmatpush1.msra.mxu0 0.0
        %2302 = vmatprep.subr.mxu0 0.0
        %2303 = vmatpush1.msra.mxu0 0.0
        %2304 = vmatprep.subr.mxu0 0.0
        %2305 = vmatpush1.msra.mxu0 0.0
        %2306 = vmatprep.subr.mxu0 0.0
        %2307 = vmatpush1.msra.mxu0 0.0
        %2308 = vmatprep.subr.mxu0 0.0
        %2309 = vmatpush1.msra.mxu0 0.0
        %2310 = vmatprep.subr.mxu0 0.0
        %2311 = vmatpush1.msra.mxu0 0.0
        %2312 = vmatprep.subr.mxu0 0.0
        %2313 = vmatpush1.msra.mxu0 0.0
        %2314 = vmatprep.subr.mxu0 0.0
        %2315 = vmatpush1.msra.mxu0 0.0
        %2316 = vmatprep.subr.mxu0 0.0
        %2317 = vmatpush1.msra.mxu0 0.0
        %2318 = vmatprep.subr.mxu0 0.0
        %2319 = vmatpush1.msra.mxu0 0.0
        %2320 = vmatprep.subr.mxu0 0.0
        %2321 = vmatpush1.msra.mxu0 0.0
        %2322 = vmatprep.subr.mxu0 0.0
        %2323 = vmatpush1.msra.mxu0 0.0
        %2324 = vmatprep.subr.mxu0 0.0
        %2325 = vmatpush1.msra.mxu0 0.0
        %2326 = vmatprep.subr.mxu0 0.0
        %2327 = vmatpush1.msra.mxu0 0.0
        %2328 = vmatprep.subr.mxu0 0.0
        %2329 = vmatpush1.msra.mxu0 0.0
        %2330 = vmatprep.subr.mxu0 0.0
        %2331 = vmatpush1.msra.mxu0 0.0
        %2332 = vmatprep.subr.mxu0 0.0
        %2333 = vmatpush1.msra.mxu0 0.0
        %2334 = vmatprep.subr.mxu0 0.0
        %2335 = vmatpush1.msra.mxu0 0.0
        %2336 = vmatprep.subr.mxu0 0.0
        %2337 = vmatpush1.msra.mxu0 0.0
        %2338 = vmatprep.subr.mxu0 0.0
        %2339 = vmatpush1.msra.mxu0 0.0
        %2340 = vmatprep.subr.mxu0 0.0
        %2341 = vmatpush1.msra.mxu0 0.0
        %2342 = vmatprep.subr.mxu0 0.0
        %2343 = vmatpush1.msra.mxu0 0.0
        %2344 = vmatprep.subr.mxu0 0.0
        %2345 = vmatpush1.msra.mxu0 0.0
        %2346 = vmatprep.subr.mxu0 0.0
        %2347 = vmatpush1.msra.mxu0 0.0
        %2348 = vmatprep.subr.mxu0 0.0
        %2349 = vmatpush1.msra.mxu0 0.0
        %2350 = vmatprep.mubr.f32.mxu0 0.0
        %v2351 = vand.u32 %v1543, 4294901760
        %v2352 = vsub.f32 %v1543, %v2351
        %2353 = vmatmul.mubr.f32.gmra.mrb[0].mxu0 %v2352
        %v2354 = vpop.f32.mrb[0].mxu0
        %v2355 = vadd.f32 %v2267, %v2354
        %v2356 = vpop.f32.mrb[0].mxu0
        %v2357 = vadd.f32 %v2269, %v2356
        %2358 = vmatprep.mubr.f32.mxu0 0.0
        %v2359 = vand.u32 %v1546, 4294901760
        %v2360 = vsub.f32 %v1546, %v2359
        %2361 = vmatmul.mubr.f32.gmra.mrb[0].mxu0 %v2360
        %v2362 = vpop.f32.mrb[0].mxu0
        %v2363 = vadd.f32 %v2274, %v2362
        %v2364 = vpop.f32.mrb[0].mxu0
        %v2365 = vadd.f32 %v2276, %v2364
        %2366 = vdwg.mxu0
        %v2367 = vand.u32 %v1529, 4294901760
        %2368 = vmatprep.subr.mxu0 %v2367
        %v2369 = vand.u32 %v1528, 4294901760
        %2370 = vmatpush1.msra.mxu0 %v2369
        %v2371 = vand.u32 %v1533, 4294901760
        %2372 = vmatprep.subr.mxu0 %v2371
        %v2373 = vand.u32 %v1532, 4294901760
        %2374 = vmatpush1.msra.mxu0 %v2373
        %2375 = vmatprep.subr.mxu0 0.0
        %2376 = vmatpush1.msra.mxu0 0.0
        %2377 = vmatprep.subr.mxu0 0.0
        %2378 = vmatpush1.msra.mxu0 0.0
        %2379 = vmatprep.subr.mxu0 0.0
        %2380 = vmatpush1.msra.mxu0 0.0
        %2381 = vmatprep.subr.mxu0 0.0
        %2382 = vmatpush1.msra.mxu0 0.0
        %2383 = vmatprep.subr.mxu0 0.0
        %2384 = vmatpush1.msra.mxu0 0.0
        %2385 = vmatprep.subr.mxu0 0.0
        %2386 = vmatpush1.msra.mxu0 0.0
        %2387 = vmatprep.subr.mxu0 0.0
        %2388 = vmatpush1.msra.mxu0 0.0
        %2389 = vmatprep.subr.mxu0 0.0
        %2390 = vmatpush1.msra.mxu0 0.0
        %2391 = vmatprep.subr.mxu0 0.0
        %2392 = vmatpush1.msra.mxu0 0.0
        %2393 = vmatprep.subr.mxu0 0.0
        %2394 = vmatpush1.msra.mxu0 0.0
        %2395 = vmatprep.subr.mxu0 0.0
        %2396 = vmatpush1.msra.mxu0 0.0
        %2397 = vmatprep.subr.mxu0 0.0
        %2398 = vmatpush1.msra.mxu0 0.0
        %2399 = vmatprep.subr.mxu0 0.0
        %2400 = vmatpush1.msra.mxu0 0.0
        %2401 = vmatprep.subr.mxu0 0.0
        %2402 = vmatpush1.msra.mxu0 0.0
        %2403 = vmatprep.subr.mxu0 0.0
        %2404 = vmatpush1.msra.mxu0 0.0
        %2405 = vmatprep.subr.mxu0 0.0
        %2406 = vmatpush1.msra.mxu0 0.0
        %2407 = vmatprep.subr.mxu0 0.0
        %2408 = vmatpush1.msra.mxu0 0.0
        %2409 = vmatprep.subr.mxu0 0.0
        %2410 = vmatpush1.msra.mxu0 0.0
        %2411 = vmatprep.subr.mxu0 0.0
        %2412 = vmatpush1.msra.mxu0 0.0
        %2413 = vmatprep.subr.mxu0 0.0
        %2414 = vmatpush1.msra.mxu0 0.0
        %2415 = vmatprep.subr.mxu0 0.0
        %2416 = vmatpush1.msra.mxu0 0.0
        %2417 = vmatprep.subr.mxu0 0.0
        %2418 = vmatpush1.msra.mxu0 0.0
        %2419 = vmatprep.subr.mxu0 0.0
        %2420 = vmatpush1.msra.mxu0 0.0
        %2421 = vmatprep.subr.mxu0 0.0
        %2422 = vmatpush1.msra.mxu0 0.0
        %2423 = vmatprep.subr.mxu0 0.0
        %2424 = vmatpush1.msra.mxu0 0.0
        %2425 = vmatprep.subr.mxu0 0.0
        %2426 = vmatpush1.msra.mxu0 0.0
        %2427 = vmatprep.subr.mxu0 0.0
        %2428 = vmatpush1.msra.mxu0 0.0
        %2429 = vmatprep.subr.mxu0 0.0
        %2430 = vmatpush1.msra.mxu0 0.0
        %2431 = vmatprep.subr.mxu0 0.0
        %2432 = vmatpush1.msra.mxu0 0.0
        %2433 = vmatprep.subr.mxu0 0.0
        %2434 = vmatpush1.msra.mxu0 0.0
        %2435 = vmatprep.mubr.f32.mxu0 0.0
        %v2436 = vand.u32 %v1543, 4294901760
        %v2437 = vsub.f32 %v1543, %v2436
        %v2438 = vand.u32 %v2437, 4294901760
        %2439 = vmatmul.mubr.f32.gmra.mrb[0].mxu0 %v2438
        %v2440 = vpop.f32.mrb[0].mxu0
        %v2441 = vadd.f32 %v2355, %v2440
        %v2442 = vpop.f32.mrb[0].mxu0
        %v2443 = vadd.f32 %v2357, %v2442
        %2444 = vmatprep.mubr.f32.mxu0 0.0
        %v2445 = vand.u32 %v1546, 4294901760
        %v2446 = vsub.f32 %v1546, %v2445
        %v2447 = vand.u32 %v2446, 4294901760
        %2448 = vmatmul.mubr.f32.gmra.mrb[0].mxu0 %v2447
        %v2449 = vpop.f32.mrb[0].mxu0
        %v2450 = vadd.f32 %v2363, %v2449
        %v2451 = vpop.f32.mrb[0].mxu0
        %v2452 = vadd.f32 %v2365, %v2451
        %2453 = vdwg.mxu0
        %v2454 = vand.u32 %v1529, 4294901760
        %v2455 = vsub.f32 %v1529, %v2454
        %v2456 = vand.u32 %v2455, 4294901760
        %2457 = vmatprep.subr.mxu0 %v2456
        %v2458 = vand.u32 %v1528, 4294901760
        %v2459 = vsub.f32 %v1528, %v2458
        %v2460 = vand.u32 %v2459, 4294901760
        %2461 = vmatpush1.msra.mxu0 %v2460
        %v2462 = vand.u32 %v1533, 4294901760
        %v2463 = vsub.f32 %v1533, %v2462
        %v2464 = vand.u32 %v2463, 4294901760
        %2465 = vmatprep.subr.mxu0 %v2464
        %v2466 = vand.u32 %v1532, 4294901760
        %v2467 = vsub.f32 %v1532, %v2466
        %v2468 = vand.u32 %v2467, 4294901760
        %2469 = vmatpush1.msra.mxu0 %v2468
        %2470 = vmatprep.subr.mxu0 0.0
        %2471 = vmatpush1.msra.mxu0 0.0
        %2472 = vmatprep.subr.mxu0 0.0
        %2473 = vmatpush1.msra.mxu0 0.0
        %2474 = vmatprep.subr.mxu0 0.0
        %2475 = vmatpush1.msra.mxu0 0.0
        %2476 = vmatprep.subr.mxu0 0.0
        %2477 = vmatpush1.msra.mxu0 0.0
        %2478 = vmatprep.subr.mxu0 0.0
        %2479 = vmatpush1.msra.mxu0 0.0
        %2480 = vmatprep.subr.mxu0 0.0
        %2481 = vmatpush1.msra.mxu0 0.0
        %2482 = vmatprep.subr.mxu0 0.0
        %2483 = vmatpush1.msra.mxu0 0.0
        %2484 = vmatprep.subr.mxu0 0.0
        %2485 = vmatpush1.msra.mxu0 0.0
        %2486 = vmatprep.subr.mxu0 0.0
        %2487 = vmatpush1.msra.mxu0 0.0
        %2488 = vmatprep.subr.mxu0 0.0
        %2489 = vmatpush1.msra.mxu0 0.0
        %2490 = vmatprep.subr.mxu0 0.0
        %2491 = vmatpush1.msra.mxu0 0.0
        %2492 = vmatprep.subr.mxu0 0.0
        %2493 = vmatpush1.msra.mxu0 0.0
        %2494 = vmatprep.subr.mxu0 0.0
        %2495 = vmatpush1.msra.mxu0 0.0
        %2496 = vmatprep.subr.mxu0 0.0
        %2497 = vmatpush1.msra.mxu0 0.0
        %2498 = vmatprep.subr.mxu0 0.0
        %2499 = vmatpush1.msra.mxu0 0.0
        %2500 = vmatprep.subr.mxu0 0.0
        %2501 = vmatpush1.msra.mxu0 0.0
        %2502 = vmatprep.subr.mxu0 0.0
        %2503 = vmatpush1.msra.mxu0 0.0
        %2504 = vmatprep.subr.mxu0 0.0
        %2505 = vmatpush1.msra.mxu0 0.0
        %2506 = vmatprep.subr.mxu0 0.0
        %2507 = vmatpush1.msra.mxu0 0.0
        %2508 = vmatprep.subr.mxu0 0.0
        %2509 = vmatpush1.msra.mxu0 0.0
        %2510 = vmatprep.subr.mxu0 0.0
        %2511 = vmatpush1.msra.mxu0 0.0
        %2512 = vmatprep.subr.mxu0 0.0
        %2513 = vmatpush1.msra.mxu0 0.0
        %2514 = vmatprep.subr.mxu0 0.0
        %2515 = vmatpush1.msra.mxu0 0.0
        %2516 = vmatprep.subr.mxu0 0.0
        %2517 = vmatpush1.msra.mxu0 0.0
        %2518 = vmatprep.subr.mxu0 0.0
        %2519 = vmatpush1.msra.mxu0 0.0
        %2520 = vmatprep.subr.mxu0 0.0
        %2521 = vmatpush1.msra.mxu0 0.0
        %2522 = vmatprep.subr.mxu0 0.0
        %2523 = vmatpush1.msra.mxu0 0.0
        %2524 = vmatprep.subr.mxu0 0.0
        %2525 = vmatpush1.msra.mxu0 0.0
        %2526 = vmatprep.subr.mxu0 0.0
        %2527 = vmatpush1.msra.mxu0 0.0
        %2528 = vmatprep.subr.mxu0 0.0
        %2529 = vmatpush1.msra.mxu0 0.0
        %2530 = vmatprep.mubr.f32.mxu0 0.0
        %v2531 = vand.u32 %v1543, 4294901760
        %2532 = vmatmul.mubr.f32.gmra.mrb[0].mxu0 %v2531
        %v2533 = vpop.f32.mrb[0].mxu0
        %v2534 = vadd.f32 %v2441, %v2533
        %v2535 = vpop.f32.mrb[0].mxu0
        %v2536 = vadd.f32 %v2443, %v2535
        %2537 = vmatprep.mubr.f32.mxu0 0.0
        %v2538 = vand.u32 %v1546, 4294901760
        %2539 = vmatmul.mubr.f32.gmra.mrb[0].mxu0 %v2538
        %v2540 = vpop.f32.mrb[0].mxu0
        %v2541 = vadd.f32 %v2450, %v2540
        %v2542 = vpop.f32.mrb[0].mxu0
        %v2543 = vadd.f32 %v2452, %v2542
        %2544 = vdwg.mxu0
        %v2545 = vand.u32 %v1529, 4294901760
        %2546 = vmatprep.subr.mxu0 %v2545
        %v2547 = vand.u32 %v1528, 4294901760
        %2548 = vmatpush1.msra.mxu0 %v2547
        %v2549 = vand.u32 %v1533, 4294901760
        %2550 = vmatprep.subr.mxu0 %v2549
        %v2551 = vand.u32 %v1532, 4294901760
        %2552 = vmatpush1.msra.mxu0 %v2551
        %2553 = vmatprep.subr.mxu0 0.0
        %2554 = vmatpush1.msra.mxu0 0.0
        %2555 = vmatprep.subr.mxu0 0.0
        %2556 = vmatpush1.msra.mxu0 0.0
        %2557 = vmatprep.subr.mxu0 0.0
        %2558 = vmatpush1.msra.mxu0 0.0
        %2559 = vmatprep.subr.mxu0 0.0
        %2560 = vmatpush1.msra.mxu0 0.0
        %2561 = vmatprep.subr.mxu0 0.0
        %2562 = vmatpush1.msra.mxu0 0.0
        %2563 = vmatprep.subr.mxu0 0.0
        %2564 = vmatpush1.msra.mxu0 0.0
        %2565 = vmatprep.subr.mxu0 0.0
        %2566 = vmatpush1.msra.mxu0 0.0
        %2567 = vmatprep.subr.mxu0 0.0
        %2568 = vmatpush1.msra.mxu0 0.0
        %2569 = vmatprep.subr.mxu0 0.0
        %2570 = vmatpush1.msra.mxu0 0.0
        %2571 = vmatprep.subr.mxu0 0.0
        %2572 = vmatpush1.msra.mxu0 0.0
        %2573 = vmatprep.subr.mxu0 0.0
        %2574 = vmatpush1.msra.mxu0 0.0
        %2575 = vmatprep.subr.mxu0 0.0
        %2576 = vmatpush1.msra.mxu0 0.0
        %2577 = vmatprep.subr.mxu0 0.0
        %2578 = vmatpush1.msra.mxu0 0.0
        %2579 = vmatprep.subr.mxu0 0.0
        %2580 = vmatpush1.msra.mxu0 0.0
        %2581 = vmatprep.subr.mxu0 0.0
        %2582 = vmatpush1.msra.mxu0 0.0
        %2583 = vmatprep.subr.mxu0 0.0
        %2584 = vmatpush1.msra.mxu0 0.0
        %2585 = vmatprep.subr.mxu0 0.0
        %2586 = vmatpush1.msra.mxu0 0.0
        %2587 = vmatprep.subr.mxu0 0.0
        %2588 = vmatpush1.msra.mxu0 0.0
        %2589 = vmatprep.subr.mxu0 0.0
        %2590 = vmatpush1.msra.mxu0 0.0
        %2591 = vmatprep.subr.mxu0 0.0
        %2592 = vmatpush1.msra.mxu0 0.0
        %2593 = vmatprep.subr.mxu0 0.0
        %2594 = vmatpush1.msra.mxu0 0.0
        %2595 = vmatprep.subr.mxu0 0.0
        %2596 = vmatpush1.msra.mxu0 0.0
        %2597 = vmatprep.subr.mxu0 0.0
        %2598 = vmatpush1.msra.mxu0 0.0
        %2599 = vmatprep.subr.mxu0 0.0
        %2600 = vmatpush1.msra.mxu0 0.0
        %2601 = vmatprep.subr.mxu0 0.0
        %2602 = vmatpush1.msra.mxu0 0.0
        %2603 = vmatprep.subr.mxu0 0.0
        %2604 = vmatpush1.msra.mxu0 0.0
        %2605 = vmatprep.subr.mxu0 0.0
        %2606 = vmatpush1.msra.mxu0 0.0
        %2607 = vmatprep.subr.mxu0 0.0
        %2608 = vmatpush1.msra.mxu0 0.0
        %2609 = vmatprep.subr.mxu0 0.0
        %2610 = vmatpush1.msra.mxu0 0.0
        %2611 = vmatprep.subr.mxu0 0.0
        %2612 = vmatpush1.msra.mxu0 0.0
        %2613 = vmatprep.mubr.f32.mxu0 0.0
        %v2614 = vand.u32 %v1543, 4294901760
        %2615 = vmatmul.mubr.f32.gmra.mrb[0].mxu0 %v2614
        %v2616 = vpop.f32.mrb[0].mxu0
        %v2617 = vadd.f32 %v2534, %v2616
        %v2618 = vpop.f32.mrb[0].mxu0
        %v2619 = vadd.f32 %v2536, %v2618
        %2620 = vmatprep.mubr.f32.mxu0 0.0
        %v2621 = vand.u32 %v1546, 4294901760
        %2622 = vmatmul.mubr.f32.gmra.mrb[0].mxu0 %v2621
        %v2623 = vpop.f32.mrb[0].mxu0
        %v2624 = vadd.f32 %v2541, %v2623
        %v2625 = vpop.f32.mrb[0].mxu0
        %v2626 = vadd.f32 %v2543, %v2625
        %2627 = vdwg.mxu0
        %vm2628 = vcmp.gt.f32.partialorder %v2077, 20.0
        %vm2629 = vcmp.gt.f32.partialorder %v2079, 20.0
        %vm2630 = vcmp.gt.f32.partialorder %v2617, 20.0
        %vm2631 = vcmp.gt.f32.partialorder %v2619, 20.0
        %vm2632 = vcmp.gt.f32.partialorder %v2084, 20.0
        %vm2633 = vcmp.gt.f32.partialorder %v2086, 20.0
        %vm2634 = vcmp.gt.f32.partialorder %v2624, 20.0
        %vm2635 = vcmp.gt.f32.partialorder %v2626, 20.0
        %v2636 = vmul.f32 %v2077, 1.442695
        %v2637 = vpow.pop %v2636
        %v2638 = vmul.f32 %v2079, 1.442695
        %v2639 = vpow.pop %v2638
        %v2640 = vmul.f32 %v2617, 1.442695
        %v2641 = vpow.pop %v2640
        %v2642 = vmul.f32 %v2619, 1.442695
        %v2643 = vpow.pop %v2642
        %v2644 = vmul.f32 %v2084, 1.442695
        %v2645 = vpow.pop %v2644
        %v2646 = vmul.f32 %v2086, 1.442695
        %v2647 = vpow.pop %v2646
        %v2648 = vmul.f32 %v2624, 1.442695
        %v2649 = vpow.pop %v2648
        %v2650 = vmul.f32 %v2626, 1.442695
        %v2651 = vpow.pop %v2650
        %v2652 = vadd.f32 %v2637, 1.0
        %v2653 = vlog2.pop %v2652
        %v2654 = vmul.f32 %v2653, 0.6931472
        %v2655 = vmul.f32 -0.5, %v2637
        %v2656 = vadd.f32 %v2655, 1.0
        %v2657 = vmul.f32 %v2656, %v2637
        %v2658 = vand.u32 2147483647, %v2637
        %vm2659 = vcmp.lt.f32.partialorder %v2658, 0.0004427343
        %v2660 = vsel %vm2659, %v2657, %v2654
        %v2661 = vadd.f32 %v2639, 1.0
        %v2662 = vlog2.pop %v2661
        %v2663 = vmul.f32 %v2662, 0.6931472
        %v2664 = vmul.f32 -0.5, %v2639
        %v2665 = vadd.f32 %v2664, 1.0
        %v2666 = vmul.f32 %v2665, %v2639
        %v2667 = vand.u32 2147483647, %v2639
        %vm2668 = vcmp.lt.f32.partialorder %v2667, 0.0004427343
        %v2669 = vsel %vm2668, %v2666, %v2663
        %v2670 = vadd.f32 %v2641, 1.0
        %v2671 = vlog2.pop %v2670
        %v2672 = vmul.f32 %v2671, 0.6931472
        %v2673 = vmul.f32 -0.5, %v2641
        %v2674 = vadd.f32 %v2673, 1.0
        %v2675 = vmul.f32 %v2674, %v2641
        %v2676 = vand.u32 2147483647, %v2641
        %vm2677 = vcmp.lt.f32.partialorder %v2676, 0.0004427343
        %v2678 = vsel %vm2677, %v2675, %v2672
        %v2679 = vadd.f32 %v2643, 1.0
        %v2680 = vlog2.pop %v2679
        %v2681 = vmul.f32 %v2680, 0.6931472
        %v2682 = vmul.f32 -0.5, %v2643
        %v2683 = vadd.f32 %v2682, 1.0
        %v2684 = vmul.f32 %v2683, %v2643
        %v2685 = vand.u32 2147483647, %v2643
        %vm2686 = vcmp.lt.f32.partialorder %v2685, 0.0004427343
        %v2687 = vsel %vm2686, %v2684, %v2681
        %v2688 = vadd.f32 %v2645, 1.0
        %v2689 = vlog2.pop %v2688
        %v2690 = vmul.f32 %v2689, 0.6931472
        %v2691 = vmul.f32 -0.5, %v2645
        %v2692 = vadd.f32 %v2691, 1.0
        %v2693 = vmul.f32 %v2692, %v2645
        %v2694 = vand.u32 2147483647, %v2645
        %vm2695 = vcmp.lt.f32.partialorder %v2694, 0.0004427343
        %v2696 = vsel %vm2695, %v2693, %v2690
        %v2697 = vadd.f32 %v2647, 1.0
        %v2698 = vlog2.pop %v2697
        %v2699 = vmul.f32 %v2698, 0.6931472
        %v2700 = vmul.f32 -0.5, %v2647
        %v2701 = vadd.f32 %v2700, 1.0
        %v2702 = vmul.f32 %v2701, %v2647
        %v2703 = vand.u32 2147483647, %v2647
        %vm2704 = vcmp.lt.f32.partialorder %v2703, 0.0004427343
        %v2705 = vsel %vm2704, %v2702, %v2699
        %v2706 = vadd.f32 %v2649, 1.0
        %v2707 = vlog2.pop %v2706
        %v2708 = vmul.f32 %v2707, 0.6931472
        %v2709 = vmul.f32 -0.5, %v2649
        %v2710 = vadd.f32 %v2709, 1.0
        %v2711 = vmul.f32 %v2710, %v2649
        %v2712 = vand.u32 2147483647, %v2649
        %vm2713 = vcmp.lt.f32.partialorder %v2712, 0.0004427343
        %v2714 = vsel %vm2713, %v2711, %v2708
        %v2715 = vadd.f32 %v2651, 1.0
        %v2716 = vlog2.pop %v2715
        %v2717 = vmul.f32 %v2716, 0.6931472
        %v2718 = vmul.f32 -0.5, %v2651
        %v2719 = vadd.f32 %v2718, 1.0
        %v2720 = vmul.f32 %v2719, %v2651
        %v2721 = vand.u32 2147483647, %v2651
        %vm2722 = vcmp.lt.f32.partialorder %v2721, 0.0004427343
        %v2723 = vsel %vm2722, %v2720, %v2717
        %v2724 = vsel %vm2628, %v2077, %v2660
        %v2725 = vsel %vm2629, %v2079, %v2669
        %v2726 = vsel %vm2630, %v2617, %v2678
        %v2727 = vsel %vm2631, %v2619, %v2687
        %v2728 = vsel %vm2632, %v2084, %v2696
        %v2729 = vsel %vm2633, %v2086, %v2705
        %v2730 = vsel %vm2634, %v2624, %v2714
        %v2731 = vsel %vm2635, %v2626, %v2723
        %2732 = vset.pattern.permute.xlu0 1
        %2733 = vperm.xlu0 %2732, %v169
        %v2734 = vpop.permute.xlu0 %2733
        %2736 = vset.pattern.permute.xlu0 1
        %2737 = vperm.xlu0 %2736, %v170
        %v2738 = vpop.permute.xlu0 %2737
        %v2740 = vmul.f32 %v2734, %v2724
        %v2741 = vmul.f32 %v2734, %v2725
        %v2742 = vmul.f32 %v2734, %v2726
        %v2743 = vmul.f32 %v2734, %v2727
        %v2744 = vmul.f32 %v2738, %v2728
        %v2745 = vmul.f32 %v2738, %v2729
        %v2746 = vmul.f32 %v2738, %v2730
        %v2747 = vmul.f32 %v2738, %v2731
        %v2748 = vadd.f32 %v2740, %v2744
        %v2749 = vrot.slane %v2748, 4
        %v2750 = vadd.f32 %v2748, %v2749
        %v2751 = vrot.slane %v2750, 2
        %v2752 = vadd.f32 %v2750, %v2751
        %v2753 = vrot.slane %v2752, 1
        %v2754 = vadd.f32 %v2752, %v2753
        %v2755 = vadd.f32 %v2741, %v2745
        %v2756 = vrot.slane %v2755, 4
        %v2757 = vadd.f32 %v2755, %v2756
        %v2758 = vrot.slane %v2757, 2
        %v2759 = vadd.f32 %v2757, %v2758
        %v2760 = vrot.slane %v2759, 1
        %v2761 = vadd.f32 %v2759, %v2760
        %v2762 = vadd.f32 %v2742, %v2746
        %v2763 = vrot.slane %v2762, 4
        %v2764 = vadd.f32 %v2762, %v2763
        %v2765 = vrot.slane %v2764, 2
        %v2766 = vadd.f32 %v2764, %v2765
        %v2767 = vrot.slane %v2766, 1
        %v2768 = vadd.f32 %v2766, %v2767
        %v2769 = vadd.f32 %v2743, %v2747
        %v2770 = vrot.slane %v2769, 4
        %v2771 = vadd.f32 %v2769, %v2770
        %v2772 = vrot.slane %v2771, 2
        %v2773 = vadd.f32 %v2771, %v2772
        %v2774 = vrot.slane %v2773, 1
        %v2775 = vadd.f32 %v2773, %v2774
        %2776 = vset.pattern.permute.xlu0 5
        %2777 = vperm.xlu0 %2776, %v169
        %v2778 = vpop.permute.xlu0 %2777
        %v2780 = vadd.f32 %v2754, %v2778
        %v2781 = vadd.f32 %v2761, %v2778
        %v2782 = vadd.f32 %v2768, %v2778
        %v2783 = vadd.f32 %v2775, %v2778
        %v2788 = vcombine.low %v2780, %v2781
        %v2789 = vcombine.low %v2782, %v2783
        %v2791 = vunpack.c.l.s4 1966171168
        %v2792 = vunpack.c.0.s8 %v2791
        %v2793 = vlaneseq
        %v2794 = vshrl.u32 %v2793, 7
        %v2795 = vsub.s32 %v2792, %v2794
        %v2796 = vrot.slane %v2788, %v2795
        %v2798 = vunpack.c.l.s4 1966171168
        %v2799 = vunpack.c.0.s8 %v2798
        %v2800 = vlaneseq
        %v2801 = vshrl.u32 %v2800, 7
        %v2802 = vsub.s32 %v2799, %v2801
        %v2803 = vrot.slane %v2789, %v2802
        %v2804 = vcombine.low %v2796, %v2803
        %v2806 = vunpack.c.l.s4 1966171168
        %v2807 = vunpack.c.0.s8 %v2806
        %v2808 = vlaneseq
        %v2809 = vshrl.u32 %v2808, 7
        %v2810 = vsub.s32 %v2807, %v2809
        %v2811 = vrot.slane %v2804, %v2810
        %v2813 = vlaneseq
        %vm2814 = vcmp.ge.s32.totalorder %v2813, 0
        %vm2815 = vcmp.lt.s32.totalorder %v2813, 512
        %vm2816 = vmand %vm2814, %vm2815
        %2817 = vst.msk [vmem:[%s162] sm:$0xf] %vm2816, %v2811
        %s2818 = sand.u32 %s93, 1
        %s2819 = scalar_lea.sflag [#allocation3], %s2818
        %s2820 = sand.u32 %s93, 1
        %s2821 = smul.addr %s2820, 4
        %s2822 = scalar_lea.vmem [#allocation2], %s2821
        // Predicated region
        $region33: #{tpu_custom_call.1} parent=31 // pred_check
          %p2823 = pneg %p103
        $region34: #{tpu_custom_call.1} parent=31 // pred_check_branch
          %2825 = sbr.rel (%p2823) target = $region36
        $region35: #{tpu_custom_call.1} parent=31 // pred_region
          %s2826 = smul.u32 4, %s17
          %s2828 = ssub.s32 64, 64
          %2829 = vsyncadd %s2819, %s2828
          %s2830 = smul.addr %s2826, 16
          %s2831 = scalar_lea.hbm %s3, %s2830
          %s2833 = sshll.u32 %s2822, 4
          %s2834 = int_to_ptr.vmem [resolvable:$true] %s2833
          %2836 = dma.vmem_to_hbm [thread:$0]  %s2834, 64, %s2831, %s2819
        $region36: #{tpu_custom_call.1} parent=31 // pred_fallthru
          _
      $region32: #{tpu_custom_call.1} parent=5 // pred_fallthru
        _
      %p2837 = scmp.le.s32.totalorder 2, %s12
      // Predicated region
      $region37: #{tpu_custom_call.1} parent=5 // pred_check
        %p2838 = pneg %p2837
      $region38: #{tpu_custom_call.1} parent=5 // pred_check_branch
        %2840 = sbr.rel (%p2838) target = $region40
      $region39: #{tpu_custom_call.1} parent=5 // pred_region
        %s2841 = ssub.s32 %s12, 2
        // Predicated region
        $region41: #{tpu_custom_call.1} parent=39 // pred_check
          %p2842 = pneg %p109
        $region42: #{tpu_custom_call.1} parent=39 // pred_check_branch
          %2844 = sbr.rel (%p2842) target = $region44
        $region43: #{tpu_custom_call.1} parent=39 // pred_region
          %s2845 = sand.u32 %s94, 1
          %s2846 = scalar_lea.sflag [#allocation3], %s2845
          %s2847 = sand.u32 %s94, 1
          %s2848 = smul.addr %s2847, 4
          %s2849 = scalar_lea.vmem [#allocation2], %s2848
          %2850 = dma.done %s2846, 64
        $region44: #{tpu_custom_call.1} parent=39 // pred_fallthru
          _
      $region40: #{tpu_custom_call.1} parent=5 // pred_fallthru
        _
    $region6: #{tpu_custom_call.1} parent=1 // loop_footer
      %s16 = sadd.s32 1, %s12
    $region7: #{tpu_custom_call.1} parent=1 // loop_footer_branch
      %11 = sbr.rel target = $region3
    $region8: #{tpu_custom_call.1} parent=1 // loop_exit
      _
    %2851 = vsyncpa [#allocation3], 1
    %s2852 = scalar_lea.sflag [#allocation3], 1
    %2853 = vsyncpa %s2852, 1

</llo_original>
